<compile_context>
chip_gen: v7x
topology: tpu7x:2x2x1
jax: 0.10.0
libtpu: 0.0.40
codegen_flags: <defaults>
</compile_context>

<pallas_src>
import jax
import jax.numpy as jnp
from jax import lax
from jax.experimental import pallas as pl
from jax.experimental.pallas import tpu as pltpu


def _round_up(x, m):
    return (x + m - 1) // m * m


# ---------------------------------------------------------------------------
# Pallas kernels
# ---------------------------------------------------------------------------

def _conv_relu_pool_kernel(p_ref, w_ref, b_ref, o_ref):
    """Fused 3x3 conv (4 corner GEMMs) + 2x2 maxpool + bias + ReLU.

    p_ref: [4, K, tm]  bf16  transposed im2col patches, one slab per pool corner
    w_ref: [Cout, K]   bf16  conv weight, K ordered (kh, kw, cin)
    b_ref: [Cout, 1]   f32   conv bias
    o_ref: [Cout, tm]  f32   pooled activations (lane-dense along tm)
    """
    w = w_ref[...]
    m = jnp.dot(w, p_ref[0], preferred_element_type=jnp.float32)
    for c in range(1, 4):
        m = jnp.maximum(m, jnp.dot(w, p_ref[c], preferred_element_type=jnp.float32))
    # ReLU is monotone and the bias is shared by all four corners, so
    # relu(maxpool(conv + b)) == relu(max_c(conv_c) + b).
    o_ref[...] = jnp.maximum(m + b_ref[...], 0.0)


def _fc_kernel(x_ref, w_ref, b_ref, o_ref):
    """Final linear layer, transposed: out[N, tb] = W[N, F] @ x[F, tb] + b."""
    o_ref[...] = (
        jnp.dot(w_ref[...], x_ref[...], preferred_element_type=jnp.float32)
        + b_ref[...]
    )


# ---------------------------------------------------------------------------
# Pallas wrappers (tiling / padding)
# ---------------------------------------------------------------------------

def _conv_relu_pool(patches, w, b, *, max_tm=1024):
    """patches: [4, K, M]; w: [Cout, K]; b: [Cout]  ->  [Cout, M] f32 (pooled)."""
    _, K, M = patches.shape
    Cout = w.shape[0]
    tm = min(max_tm, _round_up(M, 128))
    Mp = _round_up(M, tm)
    if Mp != M:
        patches = jnp.pad(patches, ((0, 0), (0, 0), (0, Mp - M)))
    out = pl.pallas_call(
        _conv_relu_pool_kernel,
        out_shape=jax.ShapeDtypeStruct((Cout, Mp), jnp.float32),
        grid=(Mp // tm,),
        in_specs=[
            pl.BlockSpec((4, K, tm), lambda i: (0, 0, i)),
            pl.BlockSpec((Cout, K), lambda i: (0, 0)),
            pl.BlockSpec((Cout, 1), lambda i: (0, 0)),
        ],
        out_specs=pl.BlockSpec((Cout, tm), lambda i: (0, i)),
        compiler_params=pltpu.CompilerParams(dimension_semantics=("parallel",)),
    )(
        patches.astype(jnp.bfloat16),
        w.astype(jnp.bfloat16),
        b.reshape(Cout, 1).astype(jnp.float32),
    )
    return out[:, :M]


def _fc(x_t, w, b, *, max_tb=512):
    """x_t: [F, B]; w: [N, F]; b: [N]  ->  [N, B] f32 logits (transposed)."""
    F, B = x_t.shape
    N = w.shape[0]
    tb = min(max_tb, _round_up(B, 128))
    Bp = _round_up(B, tb)
    if Bp != B:
        x_t = jnp.pad(x_t, ((0, 0), (0, Bp - B)))
    out = pl.pallas_call(
        _fc_kernel,
        out_shape=jax.ShapeDtypeStruct((N, Bp), jnp.float32),
        grid=(Bp // tb,),
        in_specs=[
            pl.BlockSpec((F, tb), lambda i: (0, i)),
            pl.BlockSpec((N, F), lambda i: (0, 0)),
            pl.BlockSpec((N, 1), lambda i: (0, 0)),
        ],
        out_specs=pl.BlockSpec((N, tb), lambda i: (0, i)),
        compiler_params=pltpu.CompilerParams(dimension_semantics=("parallel",)),
    )(x_t.astype(jnp.bfloat16), w.astype(jnp.bfloat16),
      b.reshape(N, 1).astype(jnp.float32))
    return out[:, :B]


# ---------------------------------------------------------------------------
# Layout glue (transposed, per-pool-corner im2col) in plain JAX
# ---------------------------------------------------------------------------

def _pool_corner_patches(x_cbhw, ksize=3, pad=1):
    """[C, B, H, W] -> [4, ksize*ksize*C, B*(H//2)*(W//2)] bf16 patch slabs.

    Axis 0 is the 2x2 pool corner (ci*2 + cj); the K axis is ordered
    (kh, kw, cin) to match the weight layout; M is (b, i, j) over pooled pixels.
    """
    C, B, H, W = x_cbhw.shape
    H2, W2 = H // 2, W // 2
    xp = jnp.pad(x_cbhw.astype(jnp.bfloat16),
                 ((0, 0), (0, 0), (pad, pad), (pad, pad)))
    shifts = [xp[:, :, kh:kh + H, kw:kw + W]
              for kh in range(ksize) for kw in range(ksize)]
    s = jnp.stack(shifts, axis=0)                       # [9, C, B, H, W]
    s = s.reshape(ksize * ksize, C, B, H2, 2, W2, 2)    # split H, W -> (pooled, corner)
    s = jnp.transpose(s, (4, 6, 0, 1, 2, 3, 5))         # [ci, cj, k, c, b, i, j]
    return s.reshape(4, ksize * ksize * C, B * H2 * W2)


# ---------------------------------------------------------------------------
# Parameters (deterministic init; same fan-in bounds as the PyTorch module)
# ---------------------------------------------------------------------------

def init_params(key):
    k1, k2, k3, k4, k5, k6 = jax.random.split(key, 6)
    # conv1: torch [8, 1, 3, 3] -> stored [Cout, (kh, kw, cin)] = [8, 9]
    bound1 = 1.0 / (1 * 3 * 3) ** 0.5
    conv1_w = jax.random.uniform(k1, (8, 3 * 3 * 1), jnp.float32, -bound1, bound1)
    conv1_b = jax.random.uniform(k2, (8,), jnp.float32, -bound1, bound1)
    # conv2: torch [16, 8, 3, 3] -> stored [16, 72] with (kh, kw, cin) ordering
    bound2 = 1.0 / (8 * 3 * 3) ** 0.5
    conv2_w = jax.random.uniform(k3, (16, 3 * 3 * 8), jnp.float32, -bound2, bound2)
    conv2_b = jax.random.uniform(k4, (16,), jnp.float32, -bound2, bound2)
    # fc1: torch [10, 784]; feature order (c, i, j) == PyTorch NCHW flatten
    bound3 = 1.0 / (16 * 7 * 7) ** 0.5
    fc1_w = jax.random.uniform(k5, (10, 16 * 7 * 7), jnp.float32, -bound3, bound3)
    fc1_b = jax.random.uniform(k6, (10,), jnp.float32, -bound3, bound3)
    return dict(conv1_w=conv1_w, conv1_b=conv1_b,
                conv2_w=conv2_w, conv2_b=conv2_b,
                fc1_w=fc1_w, fc1_b=fc1_b)


# ---------------------------------------------------------------------------
# Forward pass (mirrors CNN.forward)
# ---------------------------------------------------------------------------

@jax.jit
def cnn_forward(params, x_nchw):
    B = x_nchw.shape[0]
    x = jnp.transpose(x_nchw.astype(jnp.float32), (1, 0, 2, 3))      # [1, B, 28, 28]
    # stage 1: conv1 + ReLU + 2x2 maxpool -> [8, B, 14, 14]
    p1 = _pool_corner_patches(x)                                     # [4, 9, B*196]
    y1 = _conv_relu_pool(p1, params["conv1_w"], params["conv1_b"])   # [8, B*196]
    y1 = y1.reshape(8, B, 14, 14)
    # stage 2: conv2 + ReLU + 2x2 maxpool -> [16, B, 7, 7]
    p2 = _pool_corner_patches(y1)                                    # [4, 72, B*49]
    y2 = _conv_relu_pool(p2, params["conv2_w"], params["conv2_b"])   # [16, B*49]
    y2 = y2.reshape(16, B, 7, 7)
    # fc: feature order (c, i, j) matches PyTorch's NCHW flatten; computed transposed.
    x_fc = jnp.transpose(y2, (0, 2, 3, 1)).reshape(16 * 7 * 7, B)    # [784, B]
    logits_t = _fc(x_fc, params["fc1_w"], params["fc1_b"])           # [10, B]
    return logits_t.T                                                # [B, 10]


# ---------------------------------------------------------------------------
# Pure-JAX f32 reference (for a sanity check only)
# ---------------------------------------------------------------------------

def _reference_forward(params, x_nchw):
    x = x_nchw.astype(jnp.float32)
    w1 = params["conv1_w"].reshape(8, 3, 3, 1).transpose(0, 3, 1, 2)   # OIHW
    y = lax.conv_general_dilated(x, w1, (1, 1), ((1, 1), (1, 1)),
                                 dimension_numbers=("NCHW", "OIHW", "NCHW"))
    y = jax.nn.relu(y + params["conv1_b"].reshape(1, 8, 1, 1))
    y = lax.reduce_window(y, -jnp.inf, lax.max, (1, 1, 2, 2), (1, 1, 2, 2), "VALID")
    w2 = params["conv2_w"].reshape(16, 3, 3, 8).transpose(0, 3, 1, 2)
    y = lax.conv_general_dilated(y, w2, (1, 1), ((1, 1), (1, 1)),
                                 dimension_numbers=("NCHW", "OIHW", "NCHW"))
    y = jax.nn.relu(y + params["conv2_b"].reshape(1, 16, 1, 1))
    y = lax.reduce_window(y, -jnp.inf, lax.max, (1, 1, 2, 2), (1, 1, 2, 2), "VALID")
    y = y.reshape(y.shape[0], -1)
    return y @ params["fc1_w"].T + params["fc1_b"]


if __name__ == "__main__":
    params = init_params(jax.random.PRNGKey(0))
    # MNIST-like input implied by fc1 = Linear(16*7*7, 10): [B, 1, 28, 28]
    x = jax.random.normal(jax.random.PRNGKey(0), (2, 1, 28, 28), dtype=jnp.float32)
    logits = cnn_forward(params, x)
    jax.block_until_ready(logits)
    assert logits.shape == (2, 10), logits.shape
    ref = _reference_forward(params, x)
    err = float(jnp.max(jnp.abs(logits - ref)))
    # Loose tolerance: MXU operands are bf16 (f32 accumulation); catches layout bugs.
    assert err < 1e-1, f"mismatch vs f32 reference: {err}"
    print("KERNEL_OK")
</pallas_src>

<mosaic_0001>
module attributes {stable_mosaic.version = 11 : i64} {
  func.func @_conv_relu_pool_kernel(%arg0: i32, %arg1: memref<4x9x512xbf16, #tpu.memory_space<vmem>>, %arg2: memref<8x9xbf16, #tpu.memory_space<vmem>>, %arg3: memref<8x1xf32, #tpu.memory_space<vmem>>, %arg4: memref<8x512xf32, #tpu.memory_space<vmem>>) attributes {dimension_semantics = [#tpu.dimension_semantics<parallel>], iteration_bounds = array<i64: 1>, scalar_prefetch = 0 : i64, scratch_operands = 0 : i64, tpu.core_type = #tpu.core_type<tc>, window_params = [{transform_indices = @transform_0, window_bounds = array<i64: 4, 9, 512>}, {pipeline_mode = #tpu.pipeline_mode<synchronous>, transform_indices = @transform_1, window_bounds = array<i64: 8, 9>}, {pipeline_mode = #tpu.pipeline_mode<synchronous>, transform_indices = @transform_2, window_bounds = array<i64: 8, 1>}, {transform_indices = @transform_3, window_bounds = array<i64: 8, 512>}]} {
    %c0 = arith.constant 0 : index
    %c0_0 = arith.constant 0 : index
    %0 = vector.load %arg2[%c0, %c0_0] : memref<8x9xbf16, #tpu.memory_space<vmem>>, vector<8x9xbf16>
    %c0_1 = arith.constant 0 : index
    %c0_2 = arith.constant 0 : index
    %c0_3 = arith.constant 0 : index
    %1 = vector.load %arg1[%c0_1, %c0_2, %c0_3] : memref<4x9x512xbf16, #tpu.memory_space<vmem>>, vector<1x9x512xbf16>
    %2 = vector.shape_cast %1 : vector<1x9x512xbf16> to vector<9x512xbf16>
    %cst = arith.constant dense<0.000000e+00> : vector<8x512xf32>
    %3 = tpu.matmul %0, %2, %cst {dimension_numbers = #tpu.dot_dimension_numbers<[1], [0], [0], [1], [0, 0, 1, 1], [], []>} : vector<8x9xbf16>, vector<9x512xbf16>, vector<8x512xf32> -> vector<8x512xf32>
    %c1 = arith.constant 1 : index
    %c0_4 = arith.constant 0 : index
    %c0_5 = arith.constant 0 : index
    %4 = vector.load %arg1[%c1, %c0_4, %c0_5] : memref<4x9x512xbf16, #tpu.memory_space<vmem>>, vector<1x9x512xbf16>
    %5 = vector.shape_cast %4 : vector<1x9x512xbf16> to vector<9x512xbf16>
    %cst_6 = arith.constant dense<0.000000e+00> : vector<8x512xf32>
    %6 = tpu.matmul %0, %5, %cst_6 {dimension_numbers = #tpu.dot_dimension_numbers<[1], [0], [0], [1], [0, 0, 1, 1], [], []>} : vector<8x9xbf16>, vector<9x512xbf16>, vector<8x512xf32> -> vector<8x512xf32>
    %7 = arith.maximumf %3, %6 : vector<8x512xf32>
    %c2 = arith.constant 2 : index
    %c0_7 = arith.constant 0 : index
    %c0_8 = arith.constant 0 : index
    %8 = vector.load %arg1[%c2, %c0_7, %c0_8] : memref<4x9x512xbf16, #tpu.memory_space<vmem>>, vector<1x9x512xbf16>
    %9 = vector.shape_cast %8 : vector<1x9x512xbf16> to vector<9x512xbf16>
    %cst_9 = arith.constant dense<0.000000e+00> : vector<8x512xf32>
    %10 = tpu.matmul %0, %9, %cst_9 {dimension_numbers = #tpu.dot_dimension_numbers<[1], [0], [0], [1], [0, 0, 1, 1], [], []>} : vector<8x9xbf16>, vector<9x512xbf16>, vector<8x512xf32> -> vector<8x512xf32>
    %11 = arith.maximumf %7, %10 : vector<8x512xf32>
    %c3 = arith.constant 3 : index
    %c0_10 = arith.constant 0 : index
    %c0_11 = arith.constant 0 : index
    %12 = vector.load %arg1[%c3, %c0_10, %c0_11] : memref<4x9x512xbf16, #tpu.memory_space<vmem>>, vector<1x9x512xbf16>
    %13 = vector.shape_cast %12 : vector<1x9x512xbf16> to vector<9x512xbf16>
    %cst_12 = arith.constant dense<0.000000e+00> : vector<8x512xf32>
    %14 = tpu.matmul %0, %13, %cst_12 {dimension_numbers = #tpu.dot_dimension_numbers<[1], [0], [0], [1], [0, 0, 1, 1], [], []>} : vector<8x9xbf16>, vector<9x512xbf16>, vector<8x512xf32> -> vector<8x512xf32>
    %15 = arith.maximumf %11, %14 : vector<8x512xf32>
    %c0_13 = arith.constant 0 : index
    %c0_14 = arith.constant 0 : index
    %16 = vector.load %arg3[%c0_13, %c0_14] : memref<8x1xf32, #tpu.memory_space<vmem>>, vector<8x1xf32>
    %17 = vector.broadcast %16 : vector<8x1xf32> to vector<8x512xf32>
    %18 = arith.addf %15, %17 : vector<8x512xf32>
    %cst_15 = arith.constant 0.000000e+00 : f32
    %19 = vector.broadcast %cst_15 : f32 to vector<8x512xf32>
    %20 = arith.maximumf %18, %19 : vector<8x512xf32>
    %c0_16 = arith.constant 0 : index
    %c0_17 = arith.constant 0 : index
    %21 = vector.load %arg4[%c0_16, %c0_17] : memref<8x512xf32, #tpu.memory_space<vmem>>, vector<8x512xf32>
    tpu.vector_store %arg4[%c0_16, %c0_17], %20 {strides = array<i32>} : memref<8x512xf32, #tpu.memory_space<vmem>>, vector<8x512xf32>,
    return
  }
  func.func @transform_0(%arg0: i32) -> (i32, i32, i32) {
    %c0_i32 = arith.constant 0 : i32
    %c0_i32_0 = arith.constant 0 : i32
    %c0_i32_1 = arith.constant 0 : i32
    return %c0_i32, %c0_i32_0, %arg0 : i32, i32, i32
  }
  func.func @transform_1(%arg0: i32) -> (i32, i32) {
    %c0_i32 = arith.constant 0 : i32
    %c0_i32_0 = arith.constant 0 : i32
    %c0_i32_1 = arith.constant 0 : i32
    return %c0_i32, %c0_i32_0 : i32, i32
  }
  func.func @transform_2(%arg0: i32) -> (i32, i32) {
    %c0_i32 = arith.constant 0 : i32
    %c0_i32_0 = arith.constant 0 : i32
    %c0_i32_1 = arith.constant 0 : i32
    return %c0_i32, %c0_i32_0 : i32, i32
  }
  func.func @transform_3(%arg0: i32) -> (i32, i32) {
    %c0_i32 = arith.constant 0 : i32
    %c0_i32_0 = arith.constant 0 : i32
    return %c0_i32, %arg0 : i32, i32
  }
}

module attributes {stable_mosaic.version = 11 : i64} {
  func.func @_conv_relu_pool_kernel(%arg0: i32, %arg1: memref<4x72x128xbf16, #tpu.memory_space<vmem>>, %arg2: memref<16x72xbf16, #tpu.memory_space<vmem>>, %arg3: memref<16x1xf32, #tpu.memory_space<vmem>>, %arg4: memref<16x128xf32, #tpu.memory_space<vmem>>) attributes {dimension_semantics = [#tpu.dimension_semantics<parallel>], iteration_bounds = array<i64: 1>, scalar_prefetch = 0 : i64, scratch_operands = 0 : i64, tpu.core_type = #tpu.core_type<tc>, window_params = [{transform_indices = @transform_0, window_bounds = array<i64: 4, 72, 128>}, {pipeline_mode = #tpu.pipeline_mode<synchronous>, transform_indices = @transform_1, window_bounds = array<i64: 16, 72>}, {pipeline_mode = #tpu.pipeline_mode<synchronous>, transform_indices = @transform_2, window_bounds = array<i64: 16, 1>}, {transform_indices = @transform_3, window_bounds = array<i64: 16, 128>}]} {
    %c0 = arith.constant 0 : index
    %c0_0 = arith.constant 0 : index
    %0 = vector.load %arg2[%c0, %c0_0] : memref<16x72xbf16, #tpu.memory_space<vmem>>, vector<16x72xbf16>
    %c0_1 = arith.constant 0 : index
    %c0_2 = arith.constant 0 : index
    %c0_3 = arith.constant 0 : index
    %1 = vector.load %arg1[%c0_1, %c0_2, %c0_3] : memref<4x72x128xbf16, #tpu.memory_space<vmem>>, vector<1x72x128xbf16>
    %2 = vector.shape_cast %1 : vector<1x72x128xbf16> to vector<72x128xbf16>
    %cst = arith.constant dense<0.000000e+00> : vector<16x128xf32>
    %3 = tpu.matmul %0, %2, %cst {dimension_numbers = #tpu.dot_dimension_numbers<[1], [0], [0], [1], [0, 0, 1, 1], [], []>} : vector<16x72xbf16>, vector<72x128xbf16>, vector<16x128xf32> -> vector<16x128xf32>
    %c1 = arith.constant 1 : index
    %c0_4 = arith.constant 0 : index
    %c0_5 = arith.constant 0 : index
    %4 = vector.load %arg1[%c1, %c0_4, %c0_5] : memref<4x72x128xbf16, #tpu.memory_space<vmem>>, vector<1x72x128xbf16>
    %5 = vector.shape_cast %4 : vector<1x72x128xbf16> to vector<72x128xbf16>
    %cst_6 = arith.constant dense<0.000000e+00> : vector<16x128xf32>
    %6 = tpu.matmul %0, %5, %cst_6 {dimension_numbers = #tpu.dot_dimension_numbers<[1], [0], [0], [1], [0, 0, 1, 1], [], []>} : vector<16x72xbf16>, vector<72x128xbf16>, vector<16x128xf32> -> vector<16x128xf32>
    %7 = arith.maximumf %3, %6 : vector<16x128xf32>
    %c2 = arith.constant 2 : index
    %c0_7 = arith.constant 0 : index
    %c0_8 = arith.constant 0 : index
    %8 = vector.load %arg1[%c2, %c0_7, %c0_8] : memref<4x72x128xbf16, #tpu.memory_space<vmem>>, vector<1x72x128xbf16>
    %9 = vector.shape_cast %8 : vector<1x72x128xbf16> to vector<72x128xbf16>
    %cst_9 = arith.constant dense<0.000000e+00> : vector<16x128xf32>
    %10 = tpu.matmul %0, %9, %cst_9 {dimension_numbers = #tpu.dot_dimension_numbers<[1], [0], [0], [1], [0, 0, 1, 1], [], []>} : vector<16x72xbf16>, vector<72x128xbf16>, vector<16x128xf32> -> vector<16x128xf32>
    %11 = arith.maximumf %7, %10 : vector<16x128xf32>
    %c3 = arith.constant 3 : index
    %c0_10 = arith.constant 0 : index
    %c0_11 = arith.constant 0 : index
    %12 = vector.load %arg1[%c3, %c0_10, %c0_11] : memref<4x72x128xbf16, #tpu.memory_space<vmem>>, vector<1x72x128xbf16>
    %13 = vector.shape_cast %12 : vector<1x72x128xbf16> to vector<72x128xbf16>
    %cst_12 = arith.constant dense<0.000000e+00> : vector<16x128xf32>
    %14 = tpu.matmul %0, %13, %cst_12 {dimension_numbers = #tpu.dot_dimension_numbers<[1], [0], [0], [1], [0, 0, 1, 1], [], []>} : vector<16x72xbf16>, vector<72x128xbf16>, vector<16x128xf32> -> vector<16x128xf32>
    %15 = arith.maximumf %11, %14 : vector<16x128xf32>
    %c0_13 = arith.constant 0 : index
    %c0_14 = arith.constant 0 : index
    %16 = vector.load %arg3[%c0_13, %c0_14] : memref<16x1xf32, #tpu.memory_space<vmem>>, vector<16x1xf32>
    %17 = vector.broadcast %16 : vector<16x1xf32> to vector<16x128xf32>
    %18 = arith.addf %15, %17 : vector<16x128xf32>
    %cst_15 = arith.constant 0.000000e+00 : f32
    %19 = vector.broadcast %cst_15 : f32 to vector<16x128xf32>
    %20 = arith.maximumf %18, %19 : vector<16x128xf32>
    %c0_16 = arith.constant 0 : index
    %c0_17 = arith.constant 0 : index
    %21 = vector.load %arg4[%c0_16, %c0_17] : memref<16x128xf32, #tpu.memory_space<vmem>>, vector<16x128xf32>
    tpu.vector_store %arg4[%c0_16, %c0_17], %20 {strides = array<i32>} : memref<16x128xf32, #tpu.memory_space<vmem>>, vector<16x128xf32>,
    return
  }
  func.func @transform_0(%arg0: i32) -> (i32, i32, i32) {
    %c0_i32 = arith.constant 0 : i32
    %c0_i32_0 = arith.constant 0 : i32
    %c0_i32_1 = arith.constant 0 : i32
    return %c0_i32, %c0_i32_0, %arg0 : i32, i32, i32
  }
  func.func @transform_1(%arg0: i32) -> (i32, i32) {
    %c0_i32 = arith.constant 0 : i32
    %c0_i32_0 = arith.constant 0 : i32
    %c0_i32_1 = arith.constant 0 : i32
    return %c0_i32, %c0_i32_0 : i32, i32
  }
  func.func @transform_2(%arg0: i32) -> (i32, i32) {
    %c0_i32 = arith.constant 0 : i32
    %c0_i32_0 = arith.constant 0 : i32
    %c0_i32_1 = arith.constant 0 : i32
    return %c0_i32, %c0_i32_0 : i32, i32
  }
  func.func @transform_3(%arg0: i32) -> (i32, i32) {
    %c0_i32 = arith.constant 0 : i32
    %c0_i32_0 = arith.constant 0 : i32
    return %c0_i32, %arg0 : i32, i32
  }
}

module attributes {stable_mosaic.version = 11 : i64} {
  func.func @_fc_kernel(%arg0: i32, %arg1: memref<784x128xbf16, #tpu.memory_space<vmem>>, %arg2: memref<10x784xbf16, #tpu.memory_space<vmem>>, %arg3: memref<10x1xf32, #tpu.memory_space<vmem>>, %arg4: memref<10x128xf32, #tpu.memory_space<vmem>>) attributes {dimension_semantics = [#tpu.dimension_semantics<parallel>], iteration_bounds = array<i64: 1>, scalar_prefetch = 0 : i64, scratch_operands = 0 : i64, tpu.core_type = #tpu.core_type<tc>, window_params = [{transform_indices = @transform_0, window_bounds = array<i64: 784, 128>}, {pipeline_mode = #tpu.pipeline_mode<synchronous>, transform_indices = @transform_1, window_bounds = array<i64: 10, 784>}, {pipeline_mode = #tpu.pipeline_mode<synchronous>, transform_indices = @transform_2, window_bounds = array<i64: 10, 1>}, {transform_indices = @transform_3, window_bounds = array<i64: 10, 128>}]} {
    %c0 = arith.constant 0 : index
    %c0_0 = arith.constant 0 : index
    %0 = vector.load %arg2[%c0, %c0_0] : memref<10x784xbf16, #tpu.memory_space<vmem>>, vector<10x784xbf16>
    %c0_1 = arith.constant 0 : index
    %c0_2 = arith.constant 0 : index
    %1 = vector.load %arg1[%c0_1, %c0_2] : memref<784x128xbf16, #tpu.memory_space<vmem>>, vector<784x128xbf16>
    %cst = arith.constant dense<0.000000e+00> : vector<10x128xf32>
    %2 = tpu.matmul %0, %1, %cst {dimension_numbers = #tpu.dot_dimension_numbers<[1], [0], [0], [1], [0, 0, 1, 1], [], []>} : vector<10x784xbf16>, vector<784x128xbf16>, vector<10x128xf32> -> vector<10x128xf32>
    %c0_3 = arith.constant 0 : index
    %c0_4 = arith.constant 0 : index
    %3 = vector.load %arg3[%c0_3, %c0_4] : memref<10x1xf32, #tpu.memory_space<vmem>>, vector<10x1xf32>
    %4 = vector.broadcast %3 : vector<10x1xf32> to vector<10x128xf32>
    %5 = arith.addf %2, %4 : vector<10x128xf32>
    %c0_5 = arith.constant 0 : index
    %c0_6 = arith.constant 0 : index
    %6 = vector.load %arg4[%c0_5, %c0_6] : memref<10x128xf32, #tpu.memory_space<vmem>>, vector<10x128xf32>
    tpu.vector_store %arg4[%c0_5, %c0_6], %5 {strides = array<i32>} : memref<10x128xf32, #tpu.memory_space<vmem>>, vector<10x128xf32>,
    return
  }
  func.func @transform_0(%arg0: i32) -> (i32, i32) {
    %c0_i32 = arith.constant 0 : i32
    %c0_i32_0 = arith.constant 0 : i32
    return %c0_i32, %arg0 : i32, i32
  }
  func.func @transform_1(%arg0: i32) -> (i32, i32) {
    %c0_i32 = arith.constant 0 : i32
    %c0_i32_0 = arith.constant 0 : i32
    %c0_i32_1 = arith.constant 0 : i32
    return %c0_i32, %c0_i32_0 : i32, i32
  }
  func.func @transform_2(%arg0: i32) -> (i32, i32) {
    %c0_i32 = arith.constant 0 : i32
    %c0_i32_0 = arith.constant 0 : i32
    %c0_i32_1 = arith.constant 0 : i32
    return %c0_i32, %c0_i32_0 : i32, i32
  }
  func.func @transform_3(%arg0: i32) -> (i32, i32) {
    %c0_i32 = arith.constant 0 : i32
    %c0_i32_0 = arith.constant 0 : i32
    return %c0_i32, %arg0 : i32, i32
  }
}

</mosaic_0001>

<llo_original>
// kernel: cnn_forward.3
$region0: #{cnn_forward.3}
  #allocation0 [shape = 'u32[]', space=smem, size = 0x4, offset = 0x4, fixed_abs, tag = 'smem constant byte address 0x4 - core index']
  #allocation1 [shape = 'u32[144,128]{1,0:T(1,128)}', space=vmem, size = 0x12000, scoped, tag = 'internal scratch']
  %s0 = inlined_call_operand.vmem [shape: bf16[4,9,512], index: 0, kind: input, shape index: {}]
  %s1 = inlined_call_operand.vmem [shape: bf16[8,9], index: 1, kind: input, shape index: {}]
  %s2 = inlined_call_operand.vmem [shape: f32[8,1], index: 2, kind: input, shape index: {}]
  %s3 = inlined_call_operand.vmem [shape: f32[8,512], index: 3, kind: output, shape index: {}]
  %s4 = sld [smem:[#allocation0]]
  $region22: #{cnn_forward.3} parent=0
    _
  %s6 = ssub.s32 1, %s4
  %s7 = scalar_select 0, %s6, %s4
  // Predicated region
  $region2: #{cnn_forward.3} parent=0 // pred_check
    _
  $region3: #{cnn_forward.3} parent=0 // pred_check_branch
    %9 = sbr.rel (0) target = $region5
  $region4: #{cnn_forward.3} parent=0 // pred_region
    _
  $region5: #{cnn_forward.3} parent=0 // pred_fallthru
    _
  // Predicated region
  $region6: #{cnn_forward.3} parent=0 // pred_check
    _
  $region7: #{cnn_forward.3} parent=0 // pred_check_branch
    %11 = sbr.rel (0) target = $region9
  $region8: #{cnn_forward.3} parent=0 // pred_region
    _
  $region9: #{cnn_forward.3} parent=0 // pred_fallthru
    _
  // Predicated region
  $region10: #{cnn_forward.3} parent=0 // pred_check
    _
  $region11: #{cnn_forward.3} parent=0 // pred_check_branch
    %13 = sbr.rel (0) target = $region13
  $region12: #{cnn_forward.3} parent=0 // pred_region
    _
  $region13: #{cnn_forward.3} parent=0 // pred_fallthru
    _
  %v15 = vld [vmem:[%s1] sm:$0xf]
  %v16 = vld [vmem:[%s0] sm:$0xff]
  %v17 = vld [vmem:[%s0 + $0x8] sm:$0xff]
  %v18 = vld [vmem:[%s0 + $0x10] sm:$0x11]
  %v19 = vld [vmem:[%s0 + $0x18] sm:$0x11]
  %v24 = vunpack.c.l.b16 %v16
  %v25 = vunpack.c.h.b16 %v16
  %v26 = vunpack.c.l.b16 %v17
  %v27 = vunpack.c.h.b16 %v17
  %v28 = vunpack.c.l.b16 %v18
  %v29 = vunpack.c.h.b16 %v18
  %v30 = vunpack.c.l.b16 %v19
  %v31 = vunpack.c.h.b16 %v19
  %v32 = vpack.c.b16 %v28, %v24
  %v33 = vpack.c.b16 %v29, %v25
  %v34 = vpack.c.b16 %v30, %v26
  %v35 = vpack.c.b16 %v31, %v27
  %vm36 = vcmask 72704
  %v38 = vsel %vm36, %v15, 0
  %vm40 = vcmask 1043456
  %vm41 = vcmask 1044480
  %v42 = vsel %vm40, 4294967295, 65535
  %v43 = vsel %vm41, %v42, 0
  %v45 = vand.u32 %v32, %v43
  %v48 = vand.u32 %v33, %v43
  %v51 = vand.u32 %v34, %v43
  %v54 = vand.u32 %v35, %v43
  %56 = vmatprep.subr.bf16.mxu0 %v48
  %57 = vmatpush1.bf16.msra.mxu0 %v45
  %58 = vmatprep.subr.bf16.mxu0 0
  %59 = vmatpush1.bf16.msra.mxu0 0
  %60 = vmatprep.subr.bf16.mxu0 0
  %61 = vmatpush1.bf16.msra.mxu0 0
  %62 = vmatprep.subr.bf16.mxu0 0
  %63 = vmatpush1.bf16.msra.mxu0 0
  %64 = vmatprep.subr.bf16.mxu0 0
  %65 = vmatpush1.bf16.msra.mxu0 0
  %66 = vmatprep.subr.bf16.mxu0 0
  %67 = vmatpush1.bf16.msra.mxu0 0
  %68 = vmatprep.subr.bf16.mxu0 0
  %69 = vmatpush1.bf16.msra.mxu0 0
  %70 = vmatprep.subr.bf16.mxu0 0
  %71 = vmatpush1.bf16.msra.mxu0 0
  %72 = vmatprep.subr.bf16.mxu0 0
  %73 = vmatpush1.bf16.msra.mxu0 0
  %74 = vmatprep.subr.bf16.mxu0 0
  %75 = vmatpush1.bf16.msra.mxu0 0
  %76 = vmatprep.subr.bf16.mxu0 0
  %77 = vmatpush1.bf16.msra.mxu0 0
  %78 = vmatprep.subr.bf16.mxu0 0
  %79 = vmatpush1.bf16.msra.mxu0 0
  %80 = vmatprep.subr.bf16.mxu0 0
  %81 = vmatpush1.bf16.msra.mxu0 0
  %82 = vmatprep.subr.bf16.mxu0 0
  %83 = vmatpush1.bf16.msra.mxu0 0
  %84 = vmatprep.subr.bf16.mxu0 0
  %85 = vmatpush1.bf16.msra.mxu0 0
  %86 = vmatprep.subr.bf16.mxu0 0
  %87 = vmatpush1.bf16.msra.mxu0 0
  %88 = vmatprep.mubr.bf16.mxu0 0
  %89 = vmatmul.mubr.bf16.gmra.mrb[0].mxu0 %v38
  %v90 = vpop.f32.mrb[0].mxu0
  %v91 = vadd.f32 0.0, %v90
  %v92 = vpop.f32.mrb[0].mxu0
  %v93 = vadd.f32 0.0, %v92
  %v94 = vpop.f32.mrb[0].mxu0
  %v95 = vpop.f32.mrb[0].mxu0
  %96 = vdwg.mxu0
  %97 = vmatprep.subr.bf16.mxu0 %v54
  %98 = vmatpush1.bf16.msra.mxu0 %v51
  %99 = vmatprep.subr.bf16.mxu0 0
  %100 = vmatpush1.bf16.msra.mxu0 0
  %101 = vmatprep.subr.bf16.mxu0 0
  %102 = vmatpush1.bf16.msra.mxu0 0
  %103 = vmatprep.subr.bf16.mxu0 0
  %104 = vmatpush1.bf16.msra.mxu0 0
  %105 = vmatprep.subr.bf16.mxu0 0
  %106 = vmatpush1.bf16.msra.mxu0 0
  %107 = vmatprep.subr.bf16.mxu0 0
  %108 = vmatpush1.bf16.msra.mxu0 0
  %109 = vmatprep.subr.bf16.mxu0 0
  %110 = vmatpush1.bf16.msra.mxu0 0
  %111 = vmatprep.subr.bf16.mxu0 0
  %112 = vmatpush1.bf16.msra.mxu0 0
  %113 = vmatprep.subr.bf16.mxu0 0
  %114 = vmatpush1.bf16.msra.mxu0 0
  %115 = vmatprep.subr.bf16.mxu0 0
  %116 = vmatpush1.bf16.msra.mxu0 0
  %117 = vmatprep.subr.bf16.mxu0 0
  %118 = vmatpush1.bf16.msra.mxu0 0
  %119 = vmatprep.subr.bf16.mxu0 0
  %120 = vmatpush1.bf16.msra.mxu0 0
  %121 = vmatprep.subr.bf16.mxu0 0
  %122 = vmatpush1.bf16.msra.mxu0 0
  %123 = vmatprep.subr.bf16.mxu0 0
  %124 = vmatpush1.bf16.msra.mxu0 0
  %125 = vmatprep.subr.bf16.mxu0 0
  %126 = vmatpush1.bf16.msra.mxu0 0
  %127 = vmatprep.subr.bf16.mxu0 0
  %128 = vmatpush1.bf16.msra.mxu0 0
  %129 = vmatprep.mubr.bf16.mxu0 0
  %130 = vmatmul.mubr.bf16.gmra.mrb[0].mxu0 %v38
  %v131 = vpop.f32.mrb[0].mxu0
  %v132 = vadd.f32 0.0, %v131
  %v133 = vpop.f32.mrb[0].mxu0
  %v134 = vadd.f32 0.0, %v133
  %v135 = vpop.f32.mrb[0].mxu0
  %v136 = vpop.f32.mrb[0].mxu0
  %137 = vdwg.mxu0
  %s138 = scalar_lea.vmem %s0, 32
  %v139 = vld [vmem:[%s138] sm:$0xff]
  %v140 = vld [vmem:[%s138 + $0x8] sm:$0xff]
  %v141 = vld [vmem:[%s138 + $0x10] sm:$0x11]
  %v142 = vld [vmem:[%s138 + $0x18] sm:$0x11]
  %v147 = vunpack.c.l.b16 %v139
  %v148 = vunpack.c.h.b16 %v139
  %v149 = vunpack.c.l.b16 %v140
  %v150 = vunpack.c.h.b16 %v140
  %v151 = vunpack.c.l.b16 %v141
  %v152 = vunpack.c.h.b16 %v141
  %v153 = vunpack.c.l.b16 %v142
  %v154 = vunpack.c.h.b16 %v142
  %v155 = vpack.c.b16 %v151, %v147
  %v156 = vpack.c.b16 %v152, %v148
  %v157 = vpack.c.b16 %v153, %v149
  %v158 = vpack.c.b16 %v154, %v150
  %v160 = vand.u32 %v155, %v43
  %v163 = vand.u32 %v156, %v43
  %v166 = vand.u32 %v157, %v43
  %v169 = vand.u32 %v158, %v43
  %171 = vmatprep.subr.bf16.mxu0 %v163
  %172 = vmatpush1.bf16.msra.mxu0 %v160
  %173 = vmatprep.subr.bf16.mxu0 0
  %174 = vmatpush1.bf16.msra.mxu0 0
  %175 = vmatprep.subr.bf16.mxu0 0
  %176 = vmatpush1.bf16.msra.mxu0 0
  %177 = vmatprep.subr.bf16.mxu0 0
  %178 = vmatpush1.bf16.msra.mxu0 0
  %179 = vmatprep.subr.bf16.mxu0 0
  %180 = vmatpush1.bf16.msra.mxu0 0
  %181 = vmatprep.subr.bf16.mxu0 0
  %182 = vmatpush1.bf16.msra.mxu0 0
  %183 = vmatprep.subr.bf16.mxu0 0
  %184 = vmatpush1.bf16.msra.mxu0 0
  %185 = vmatprep.subr.bf16.mxu0 0
  %186 = vmatpush1.bf16.msra.mxu0 0
  %187 = vmatprep.subr.bf16.mxu0 0
  %188 = vmatpush1.bf16.msra.mxu0 0
  %189 = vmatprep.subr.bf16.mxu0 0
  %190 = vmatpush1.bf16.msra.mxu0 0
  %191 = vmatprep.subr.bf16.mxu0 0
  %192 = vmatpush1.bf16.msra.mxu0 0
  %193 = vmatprep.subr.bf16.mxu0 0
  %194 = vmatpush1.bf16.msra.mxu0 0
  %195 = vmatprep.subr.bf16.mxu0 0
  %196 = vmatpush1.bf16.msra.mxu0 0
  %197 = vmatprep.subr.bf16.mxu0 0
  %198 = vmatpush1.bf16.msra.mxu0 0
  %199 = vmatprep.subr.bf16.mxu0 0
  %200 = vmatpush1.bf16.msra.mxu0 0
  %201 = vmatprep.subr.bf16.mxu0 0
  %202 = vmatpush1.bf16.msra.mxu0 0
  %203 = vmatprep.mubr.bf16.mxu0 0
  %204 = vmatmul.mubr.bf16.gmra.mrb[0].mxu0 %v38
  %v205 = vpop.f32.mrb[0].mxu0
  %v206 = vadd.f32 0.0, %v205
  %v207 = vpop.f32.mrb[0].mxu0
  %v208 = vadd.f32 0.0, %v207
  %v209 = vpop.f32.mrb[0].mxu0
  %v210 = vpop.f32.mrb[0].mxu0
  %211 = vdwg.mxu0
  %212 = vmatprep.subr.bf16.mxu0 %v169
  %213 = vmatpush1.bf16.msra.mxu0 %v166
  %214 = vmatprep.subr.bf16.mxu0 0
  %215 = vmatpush1.bf16.msra.mxu0 0
  %216 = vmatprep.subr.bf16.mxu0 0
  %217 = vmatpush1.bf16.msra.mxu0 0
  %218 = vmatprep.subr.bf16.mxu0 0
  %219 = vmatpush1.bf16.msra.mxu0 0
  %220 = vmatprep.subr.bf16.mxu0 0
  %221 = vmatpush1.bf16.msra.mxu0 0
  %222 = vmatprep.subr.bf16.mxu0 0
  %223 = vmatpush1.bf16.msra.mxu0 0
  %224 = vmatprep.subr.bf16.mxu0 0
  %225 = vmatpush1.bf16.msra.mxu0 0
  %226 = vmatprep.subr.bf16.mxu0 0
  %227 = vmatpush1.bf16.msra.mxu0 0
  %228 = vmatprep.subr.bf16.mxu0 0
  %229 = vmatpush1.bf16.msra.mxu0 0
  %230 = vmatprep.subr.bf16.mxu0 0
  %231 = vmatpush1.bf16.msra.mxu0 0
  %232 = vmatprep.subr.bf16.mxu0 0
  %233 = vmatpush1.bf16.msra.mxu0 0
  %234 = vmatprep.subr.bf16.mxu0 0
  %235 = vmatpush1.bf16.msra.mxu0 0
  %236 = vmatprep.subr.bf16.mxu0 0
  %237 = vmatpush1.bf16.msra.mxu0 0
  %238 = vmatprep.subr.bf16.mxu0 0
  %239 = vmatpush1.bf16.msra.mxu0 0
  %240 = vmatprep.subr.bf16.mxu0 0
  %241 = vmatpush1.bf16.msra.mxu0 0
  %242 = vmatprep.subr.bf16.mxu0 0
  %243 = vmatpush1.bf16.msra.mxu0 0
  %244 = vmatprep.mubr.bf16.mxu0 0
  %245 = vmatmul.mubr.bf16.gmra.mrb[0].mxu0 %v38
  %v246 = vpop.f32.mrb[0].mxu0
  %v247 = vadd.f32 0.0, %v246
  %v248 = vpop.f32.mrb[0].mxu0
  %v249 = vadd.f32 0.0, %v248
  %v250 = vpop.f32.mrb[0].mxu0
  %v251 = vpop.f32.mrb[0].mxu0
  %252 = vdwg.mxu0
  %v253 = vmax.f32 %v91, %v206
  %v254 = vmax.f32 %v93, %v208
  %v255 = vmax.f32 %v132, %v247
  %v256 = vmax.f32 %v134, %v249
  %s257 = scalar_lea.vmem %s0, 64
  %v258 = vld [vmem:[%s257] sm:$0xff]
  %v259 = vld [vmem:[%s257 + $0x8] sm:$0xff]
  %v260 = vld [vmem:[%s257 + $0x10] sm:$0x11]
  %v261 = vld [vmem:[%s257 + $0x18] sm:$0x11]
  %v266 = vunpack.c.l.b16 %v258
  %v267 = vunpack.c.h.b16 %v258
  %v268 = vunpack.c.l.b16 %v259
  %v269 = vunpack.c.h.b16 %v259
  %v270 = vunpack.c.l.b16 %v260
  %v271 = vunpack.c.h.b16 %v260
  %v272 = vunpack.c.l.b16 %v261
  %v273 = vunpack.c.h.b16 %v261
  %v274 = vpack.c.b16 %v270, %v266
  %v275 = vpack.c.b16 %v271, %v267
  %v276 = vpack.c.b16 %v272, %v268
  %v277 = vpack.c.b16 %v273, %v269
  %v279 = vand.u32 %v274, %v43
  %v282 = vand.u32 %v275, %v43
  %v285 = vand.u32 %v276, %v43
  %v288 = vand.u32 %v277, %v43
  %290 = vmatprep.subr.bf16.mxu0 %v282
  %291 = vmatpush1.bf16.msra.mxu0 %v279
  %292 = vmatprep.subr.bf16.mxu0 0
  %293 = vmatpush1.bf16.msra.mxu0 0
  %294 = vmatprep.subr.bf16.mxu0 0
  %295 = vmatpush1.bf16.msra.mxu0 0
  %296 = vmatprep.subr.bf16.mxu0 0
  %297 = vmatpush1.bf16.msra.mxu0 0
  %298 = vmatprep.subr.bf16.mxu0 0
  %299 = vmatpush1.bf16.msra.mxu0 0
  %300 = vmatprep.subr.bf16.mxu0 0
  %301 = vmatpush1.bf16.msra.mxu0 0
  %302 = vmatprep.subr.bf16.mxu0 0
  %303 = vmatpush1.bf16.msra.mxu0 0
  %304 = vmatprep.subr.bf16.mxu0 0
  %305 = vmatpush1.bf16.msra.mxu0 0
  %306 = vmatprep.subr.bf16.mxu0 0
  %307 = vmatpush1.bf16.msra.mxu0 0
  %308 = vmatprep.subr.bf16.mxu0 0
  %309 = vmatpush1.bf16.msra.mxu0 0
  %310 = vmatprep.subr.bf16.mxu0 0
  %311 = vmatpush1.bf16.msra.mxu0 0
  %312 = vmatprep.subr.bf16.mxu0 0
  %313 = vmatpush1.bf16.msra.mxu0 0
  %314 = vmatprep.subr.bf16.mxu0 0
  %315 = vmatpush1.bf16.msra.mxu0 0
  %316 = vmatprep.subr.bf16.mxu0 0
  %317 = vmatpush1.bf16.msra.mxu0 0
  %318 = vmatprep.subr.bf16.mxu0 0
  %319 = vmatpush1.bf16.msra.mxu0 0
  %320 = vmatprep.subr.bf16.mxu0 0
  %321 = vmatpush1.bf16.msra.mxu0 0
  %322 = vmatprep.mubr.bf16.mxu0 0
  %323 = vmatmul.mubr.bf16.gmra.mrb[0].mxu0 %v38
  %v324 = vpop.f32.mrb[0].mxu0
  %v325 = vadd.f32 0.0, %v324
  %v326 = vpop.f32.mrb[0].mxu0
  %v327 = vadd.f32 0.0, %v326
  %v328 = vpop.f32.mrb[0].mxu0
  %v329 = vpop.f32.mrb[0].mxu0
  %330 = vdwg.mxu0
  %331 = vmatprep.subr.bf16.mxu0 %v288
  %332 = vmatpush1.bf16.msra.mxu0 %v285
  %333 = vmatprep.subr.bf16.mxu0 0
  %334 = vmatpush1.bf16.msra.mxu0 0
  %335 = vmatprep.subr.bf16.mxu0 0
  %336 = vmatpush1.bf16.msra.mxu0 0
  %337 = vmatprep.subr.bf16.mxu0 0
  %338 = vmatpush1.bf16.msra.mxu0 0
  %339 = vmatprep.subr.bf16.mxu0 0
  %340 = vmatpush1.bf16.msra.mxu0 0
  %341 = vmatprep.subr.bf16.mxu0 0
  %342 = vmatpush1.bf16.msra.mxu0 0
  %343 = vmatprep.subr.bf16.mxu0 0
  %344 = vmatpush1.bf16.msra.mxu0 0
  %345 = vmatprep.subr.bf16.mxu0 0
  %346 = vmatpush1.bf16.msra.mxu0 0
  %347 = vmatprep.subr.bf16.mxu0 0
  %348 = vmatpush1.bf16.msra.mxu0 0
  %349 = vmatprep.subr.bf16.mxu0 0
  %350 = vmatpush1.bf16.msra.mxu0 0
  %351 = vmatprep.subr.bf16.mxu0 0
  %352 = vmatpush1.bf16.msra.mxu0 0
  %353 = vmatprep.subr.bf16.mxu0 0
  %354 = vmatpush1.bf16.msra.mxu0 0
  %355 = vmatprep.subr.bf16.mxu0 0
  %356 = vmatpush1.bf16.msra.mxu0 0
  %357 = vmatprep.subr.bf16.mxu0 0
  %358 = vmatpush1.bf16.msra.mxu0 0
  %359 = vmatprep.subr.bf16.mxu0 0
  %360 = vmatpush1.bf16.msra.mxu0 0
  %361 = vmatprep.subr.bf16.mxu0 0
  %362 = vmatpush1.bf16.msra.mxu0 0
  %363 = vmatprep.mubr.bf16.mxu0 0
  %364 = vmatmul.mubr.bf16.gmra.mrb[0].mxu0 %v38
  %v365 = vpop.f32.mrb[0].mxu0
  %v366 = vadd.f32 0.0, %v365
  %v367 = vpop.f32.mrb[0].mxu0
  %v368 = vadd.f32 0.0, %v367
  %v369 = vpop.f32.mrb[0].mxu0
  %v370 = vpop.f32.mrb[0].mxu0
  %371 = vdwg.mxu0
  %v372 = vmax.f32 %v253, %v325
  %v373 = vmax.f32 %v254, %v327
  %v374 = vmax.f32 %v255, %v366
  %v375 = vmax.f32 %v256, %v368
  %s376 = scalar_lea.vmem %s0, 96
  %v377 = vld [vmem:[%s376] sm:$0xff]
  %v378 = vld [vmem:[%s376 + $0x8] sm:$0xff]
  %v379 = vld [vmem:[%s376 + $0x10] sm:$0x11]
  %v380 = vld [vmem:[%s376 + $0x18] sm:$0x11]
  %v385 = vunpack.c.l.b16 %v377
  %v386 = vunpack.c.h.b16 %v377
  %v387 = vunpack.c.l.b16 %v378
  %v388 = vunpack.c.h.b16 %v378
  %v389 = vunpack.c.l.b16 %v379
  %v390 = vunpack.c.h.b16 %v379
  %v391 = vunpack.c.l.b16 %v380
  %v392 = vunpack.c.h.b16 %v380
  %v393 = vpack.c.b16 %v389, %v385
  %v394 = vpack.c.b16 %v390, %v386
  %v395 = vpack.c.b16 %v391, %v387
  %v396 = vpack.c.b16 %v392, %v388
  %v398 = vand.u32 %v393, %v43
  %v401 = vand.u32 %v394, %v43
  %v404 = vand.u32 %v395, %v43
  %v407 = vand.u32 %v396, %v43
  %409 = vmatprep.subr.bf16.mxu0 %v401
  %410 = vmatpush1.bf16.msra.mxu0 %v398
  %411 = vmatprep.subr.bf16.mxu0 0
  %412 = vmatpush1.bf16.msra.mxu0 0
  %413 = vmatprep.subr.bf16.mxu0 0
  %414 = vmatpush1.bf16.msra.mxu0 0
  %415 = vmatprep.subr.bf16.mxu0 0
  %416 = vmatpush1.bf16.msra.mxu0 0
  %417 = vmatprep.subr.bf16.mxu0 0
  %418 = vmatpush1.bf16.msra.mxu0 0
  %419 = vmatprep.subr.bf16.mxu0 0
  %420 = vmatpush1.bf16.msra.mxu0 0
  %421 = vmatprep.subr.bf16.mxu0 0
  %422 = vmatpush1.bf16.msra.mxu0 0
  %423 = vmatprep.subr.bf16.mxu0 0
  %424 = vmatpush1.bf16.msra.mxu0 0
  %425 = vmatprep.subr.bf16.mxu0 0
  %426 = vmatpush1.bf16.msra.mxu0 0
  %427 = vmatprep.subr.bf16.mxu0 0
  %428 = vmatpush1.bf16.msra.mxu0 0
  %429 = vmatprep.subr.bf16.mxu0 0
  %430 = vmatpush1.bf16.msra.mxu0 0
  %431 = vmatprep.subr.bf16.mxu0 0
  %432 = vmatpush1.bf16.msra.mxu0 0
  %433 = vmatprep.subr.bf16.mxu0 0
  %434 = vmatpush1.bf16.msra.mxu0 0
  %435 = vmatprep.subr.bf16.mxu0 0
  %436 = vmatpush1.bf16.msra.mxu0 0
  %437 = vmatprep.subr.bf16.mxu0 0
  %438 = vmatpush1.bf16.msra.mxu0 0
  %439 = vmatprep.subr.bf16.mxu0 0
  %440 = vmatpush1.bf16.msra.mxu0 0
  %441 = vmatprep.mubr.bf16.mxu0 0
  %442 = vmatmul.mubr.bf16.gmra.mrb[0].mxu0 %v38
  %v443 = vpop.f32.mrb[0].mxu0
  %v444 = vadd.f32 0.0, %v443
  %v445 = vpop.f32.mrb[0].mxu0
  %v446 = vadd.f32 0.0, %v445
  %v447 = vpop.f32.mrb[0].mxu0
  %v448 = vpop.f32.mrb[0].mxu0
  %449 = vdwg.mxu0
  %450 = vmatprep.subr.bf16.mxu0 %v407
  %451 = vmatpush1.bf16.msra.mxu0 %v404
  %452 = vmatprep.subr.bf16.mxu0 0
  %453 = vmatpush1.bf16.msra.mxu0 0
  %454 = vmatprep.subr.bf16.mxu0 0
  %455 = vmatpush1.bf16.msra.mxu0 0
  %456 = vmatprep.subr.bf16.mxu0 0
  %457 = vmatpush1.bf16.msra.mxu0 0
  %458 = vmatprep.subr.bf16.mxu0 0
  %459 = vmatpush1.bf16.msra.mxu0 0
  %460 = vmatprep.subr.bf16.mxu0 0
  %461 = vmatpush1.bf16.msra.mxu0 0
  %462 = vmatprep.subr.bf16.mxu0 0
  %463 = vmatpush1.bf16.msra.mxu0 0
  %464 = vmatprep.subr.bf16.mxu0 0
  %465 = vmatpush1.bf16.msra.mxu0 0
  %466 = vmatprep.subr.bf16.mxu0 0
  %467 = vmatpush1.bf16.msra.mxu0 0
  %468 = vmatprep.subr.bf16.mxu0 0
  %469 = vmatpush1.bf16.msra.mxu0 0
  %470 = vmatprep.subr.bf16.mxu0 0
  %471 = vmatpush1.bf16.msra.mxu0 0
  %472 = vmatprep.subr.bf16.mxu0 0
  %473 = vmatpush1.bf16.msra.mxu0 0
  %474 = vmatprep.subr.bf16.mxu0 0
  %475 = vmatpush1.bf16.msra.mxu0 0
  %476 = vmatprep.subr.bf16.mxu0 0
  %477 = vmatpush1.bf16.msra.mxu0 0
  %478 = vmatprep.subr.bf16.mxu0 0
  %479 = vmatpush1.bf16.msra.mxu0 0
  %480 = vmatprep.subr.bf16.mxu0 0
  %481 = vmatpush1.bf16.msra.mxu0 0
  %482 = vmatprep.mubr.bf16.mxu0 0
  %483 = vmatmul.mubr.bf16.gmra.mrb[0].mxu0 %v38
  %v484 = vpop.f32.mrb[0].mxu0
  %v485 = vadd.f32 0.0, %v484
  %v486 = vpop.f32.mrb[0].mxu0
  %v487 = vadd.f32 0.0, %v486
  %v488 = vpop.f32.mrb[0].mxu0
  %v489 = vpop.f32.mrb[0].mxu0
  %490 = vdwg.mxu0
  %v491 = vmax.f32 %v372, %v444
  %v492 = vmax.f32 %v373, %v446
  %v493 = vmax.f32 %v374, %v485
  %v494 = vmax.f32 %v375, %v487
  %v495 = vld [vmem:[%s2] sm:$0xff]
  %497 = vset.pattern.permute.xlu0 0
  %498 = vperm.xlu0 %497, %v495
  %v499 = vpop.permute.xlu0 %498
  %v501 = vadd.f32 %v491, %v499
  %v502 = vadd.f32 %v492, %v499
  %v503 = vadd.f32 %v493, %v499
  %v504 = vadd.f32 %v494, %v499
  %v505 = vmax.f32 %v501, 0.0
  %v506 = vmax.f32 %v502, 0.0
  %v507 = vmax.f32 %v503, 0.0
  %v508 = vmax.f32 %v504, 0.0
  %509 = vst [vmem:[%s3] sm:$0xff] %v505
  %510 = vst [vmem:[%s3 + $0x8] sm:$0xff] %v506
  %511 = vst [vmem:[%s3 + $0x10] sm:$0xff] %v507
  %512 = vst [vmem:[%s3 + $0x18] sm:$0xff] %v508
  // Predicated region
  $region14: #{cnn_forward.3} parent=0 // pred_check
    _
  $region15: #{cnn_forward.3} parent=0 // pred_check_branch
    %514 = sbr.rel (0) target = $region17
  $region16: #{cnn_forward.3} parent=0 // pred_region
    _
  $region17: #{cnn_forward.3} parent=0 // pred_fallthru
    _
  // Predicated region
  $region18: #{cnn_forward.3} parent=0 // pred_check
    _
  $region19: #{cnn_forward.3} parent=0 // pred_check_branch
    %516 = sbr.rel (0) target = $region21
  $region20: #{cnn_forward.3} parent=0 // pred_region
    _
  $region21: #{cnn_forward.3} parent=0 // pred_fallthru
    _

// kernel: cnn_forward.4
$region0: #{cnn_forward.4}
  #allocation0 [shape = 'u32[]', space=smem, size = 0x4, offset = 0x4, fixed_abs, tag = 'smem constant byte address 0x4 - core index']
  #allocation1 [shape = 'u32[144,128]{1,0:T(1,128)}', space=vmem, size = 0x12000, scoped, tag = 'internal scratch']
  %s0 = inlined_call_operand.vmem [shape: bf16[4,72,128], index: 0, kind: input, shape index: {}]
  %s1 = inlined_call_operand.vmem [shape: bf16[16,72], index: 1, kind: input, shape index: {}]
  %s2 = inlined_call_operand.vmem [shape: f32[16,1], index: 2, kind: input, shape index: {}]
  %s3 = inlined_call_operand.vmem [shape: f32[16,128], index: 3, kind: output, shape index: {}]
  %s4 = sld [smem:[#allocation0]]
  $region22: #{cnn_forward.4} parent=0
    _
  %s6 = ssub.s32 1, %s4
  %s7 = scalar_select 0, %s6, %s4
  // Predicated region
  $region2: #{cnn_forward.4} parent=0 // pred_check
    _
  $region3: #{cnn_forward.4} parent=0 // pred_check_branch
    %9 = sbr.rel (0) target = $region5
  $region4: #{cnn_forward.4} parent=0 // pred_region
    _
  $region5: #{cnn_forward.4} parent=0 // pred_fallthru
    _
  // Predicated region
  $region6: #{cnn_forward.4} parent=0 // pred_check
    _
  $region7: #{cnn_forward.4} parent=0 // pred_check_branch
    %11 = sbr.rel (0) target = $region9
  $region8: #{cnn_forward.4} parent=0 // pred_region
    _
  $region9: #{cnn_forward.4} parent=0 // pred_fallthru
    _
  // Predicated region
  $region10: #{cnn_forward.4} parent=0 // pred_check
    _
  $region11: #{cnn_forward.4} parent=0 // pred_check_branch
    %13 = sbr.rel (0) target = $region13
  $region12: #{cnn_forward.4} parent=0 // pred_region
    _
  $region13: #{cnn_forward.4} parent=0 // pred_fallthru
    _
  %v15 = vld [vmem:[%s1] sm:$0xf]
  %v16 = vld [vmem:[%s1 + $0x4] sm:$0xf]
  %v17 = vld [vmem:[%s0] sm:$0xf]
  %v18 = vld [vmem:[%s0 + $0x4] sm:$0xf]
  %v19 = vld [vmem:[%s0 + $0x8] sm:$0xf]
  %v20 = vld [vmem:[%s0 + $0xc] sm:$0xf]
  %v21 = vld [vmem:[%s0 + $0x10] sm:$0xf]
  %v22 = vld [vmem:[%s0 + $0x14] sm:$0xf]
  %v23 = vld [vmem:[%s0 + $0x18] sm:$0xf]
  %v24 = vld [vmem:[%s0 + $0x1c] sm:$0xf]
  %v25 = vld [vmem:[%s0 + $0x20] sm:$0xf]
  %v28 = vunpack.c.l.b16 %v15
  %v29 = vunpack.c.l.b16 %v16
  %v30 = vpack.c.b16 %v29, %v28
  %v40 = vunpack.c.l.b16 %v17
  %v41 = vunpack.c.l.b16 %v18
  %v42 = vunpack.c.l.b16 %v19
  %v43 = vunpack.c.l.b16 %v20
  %v44 = vunpack.c.l.b16 %v21
  %v45 = vunpack.c.l.b16 %v22
  %v46 = vunpack.c.l.b16 %v23
  %v47 = vunpack.c.l.b16 %v24
  %v48 = vunpack.c.l.b16 %v25
  %v49 = vpack.c.b16 %v41, %v40
  %v50 = vpack.c.b16 %v43, %v42
  %v51 = vpack.c.b16 %v45, %v44
  %v52 = vpack.c.b16 %v47, %v46
  %v53 = vpack.c.b16 %v48, %v48
  %vm58 = vcmask 588800
  %v60 = vsel %vm58, %v30, 0
  %vm62 = vcmask 1043456
  %v64 = vsel %vm62, %v53, 0
  %66 = vmatprep.subr.bf16.mxu0 0
  %67 = vmatpush1.bf16.msra.mxu0 %v49
  %68 = vmatprep.subr.bf16.mxu0 0
  %69 = vmatpush1.bf16.msra.mxu0 %v50
  %70 = vmatprep.subr.bf16.mxu0 0
  %71 = vmatpush1.bf16.msra.mxu0 %v51
  %72 = vmatprep.subr.bf16.mxu0 0
  %73 = vmatpush1.bf16.msra.mxu0 %v52
  %74 = vmatprep.subr.bf16.mxu0 0
  %75 = vmatpush1.bf16.msra.mxu0 %v64
  %76 = vmatprep.subr.bf16.mxu0 0
  %77 = vmatpush1.bf16.msra.mxu0 0
  %78 = vmatprep.subr.bf16.mxu0 0
  %79 = vmatpush1.bf16.msra.mxu0 0
  %80 = vmatprep.subr.bf16.mxu0 0
  %81 = vmatpush1.bf16.msra.mxu0 0
  %82 = vmatprep.subr.bf16.mxu0 0
  %83 = vmatpush1.bf16.msra.mxu0 0
  %84 = vmatprep.subr.bf16.mxu0 0
  %85 = vmatpush1.bf16.msra.mxu0 0
  %86 = vmatprep.subr.bf16.mxu0 0
  %87 = vmatpush1.bf16.msra.mxu0 0
  %88 = vmatprep.subr.bf16.mxu0 0
  %89 = vmatpush1.bf16.msra.mxu0 0
  %90 = vmatprep.subr.bf16.mxu0 0
  %91 = vmatpush1.bf16.msra.mxu0 0
  %92 = vmatprep.subr.bf16.mxu0 0
  %93 = vmatpush1.bf16.msra.mxu0 0
  %94 = vmatprep.subr.bf16.mxu0 0
  %95 = vmatpush1.bf16.msra.mxu0 0
  %96 = vmatprep.subr.bf16.mxu0 0
  %97 = vmatpush1.bf16.msra.mxu0 0
  %98 = vmatprep.mubr.bf16.mxu0 0
  %99 = vmatmul.mubr.bf16.gmra.mrb[0].mxu0 %v60
  %v100 = vpop.f32.mrb[0].mxu0
  %v101 = vadd.f32 0.0, %v100
  %v102 = vpop.f32.mrb[0].mxu0
  %v103 = vpop.f32.mrb[0].mxu0
  %v104 = vadd.f32 0.0, %v103
  %v105 = vpop.f32.mrb[0].mxu0
  %106 = vdwg.mxu0
  %s107 = scalar_lea.vmem %s0, 36
  %v108 = vld [vmem:[%s107] sm:$0xf]
  %v109 = vld [vmem:[%s107 + $0x4] sm:$0xf]
  %v110 = vld [vmem:[%s107 + $0x8] sm:$0xf]
  %v111 = vld [vmem:[%s107 + $0xc] sm:$0xf]
  %v112 = vld [vmem:[%s107 + $0x10] sm:$0xf]
  %v113 = vld [vmem:[%s107 + $0x14] sm:$0xf]
  %v114 = vld [vmem:[%s107 + $0x18] sm:$0xf]
  %v115 = vld [vmem:[%s107 + $0x1c] sm:$0xf]
  %v116 = vld [vmem:[%s107 + $0x20] sm:$0xf]
  %v126 = vunpack.c.l.b16 %v108
  %v127 = vunpack.c.l.b16 %v109
  %v128 = vunpack.c.l.b16 %v110
  %v129 = vunpack.c.l.b16 %v111
  %v130 = vunpack.c.l.b16 %v112
  %v131 = vunpack.c.l.b16 %v113
  %v132 = vunpack.c.l.b16 %v114
  %v133 = vunpack.c.l.b16 %v115
  %v134 = vunpack.c.l.b16 %v116
  %v135 = vpack.c.b16 %v127, %v126
  %v136 = vpack.c.b16 %v129, %v128
  %v137 = vpack.c.b16 %v131, %v130
  %v138 = vpack.c.b16 %v133, %v132
  %v139 = vpack.c.b16 %v134, %v134
  %v145 = vsel %vm62, %v139, 0
  %147 = vmatprep.subr.bf16.mxu0 0
  %148 = vmatpush1.bf16.msra.mxu0 %v135
  %149 = vmatprep.subr.bf16.mxu0 0
  %150 = vmatpush1.bf16.msra.mxu0 %v136
  %151 = vmatprep.subr.bf16.mxu0 0
  %152 = vmatpush1.bf16.msra.mxu0 %v137
  %153 = vmatprep.subr.bf16.mxu0 0
  %154 = vmatpush1.bf16.msra.mxu0 %v138
  %155 = vmatprep.subr.bf16.mxu0 0
  %156 = vmatpush1.bf16.msra.mxu0 %v145
  %157 = vmatprep.subr.bf16.mxu0 0
  %158 = vmatpush1.bf16.msra.mxu0 0
  %159 = vmatprep.subr.bf16.mxu0 0
  %160 = vmatpush1.bf16.msra.mxu0 0
  %161 = vmatprep.subr.bf16.mxu0 0
  %162 = vmatpush1.bf16.msra.mxu0 0
  %163 = vmatprep.subr.bf16.mxu0 0
  %164 = vmatpush1.bf16.msra.mxu0 0
  %165 = vmatprep.subr.bf16.mxu0 0
  %166 = vmatpush1.bf16.msra.mxu0 0
  %167 = vmatprep.subr.bf16.mxu0 0
  %168 = vmatpush1.bf16.msra.mxu0 0
  %169 = vmatprep.subr.bf16.mxu0 0
  %170 = vmatpush1.bf16.msra.mxu0 0
  %171 = vmatprep.subr.bf16.mxu0 0
  %172 = vmatpush1.bf16.msra.mxu0 0
  %173 = vmatprep.subr.bf16.mxu0 0
  %174 = vmatpush1.bf16.msra.mxu0 0
  %175 = vmatprep.subr.bf16.mxu0 0
  %176 = vmatpush1.bf16.msra.mxu0 0
  %177 = vmatprep.subr.bf16.mxu0 0
  %178 = vmatpush1.bf16.msra.mxu0 0
  %179 = vmatprep.mubr.bf16.mxu0 0
  %180 = vmatmul.mubr.bf16.gmra.mrb[0].mxu0 %v60
  %v181 = vpop.f32.mrb[0].mxu0
  %v182 = vadd.f32 0.0, %v181
  %v183 = vpop.f32.mrb[0].mxu0
  %v184 = vpop.f32.mrb[0].mxu0
  %v185 = vadd.f32 0.0, %v184
  %v186 = vpop.f32.mrb[0].mxu0
  %187 = vdwg.mxu0
  %v188 = vmax.f32 %v101, %v182
  %v189 = vmax.f32 %v104, %v185
  %s190 = scalar_lea.vmem %s0, 72
  %v191 = vld [vmem:[%s190] sm:$0xf]
  %v192 = vld [vmem:[%s190 + $0x4] sm:$0xf]
  %v193 = vld [vmem:[%s190 + $0x8] sm:$0xf]
  %v194 = vld [vmem:[%s190 + $0xc] sm:$0xf]
  %v195 = vld [vmem:[%s190 + $0x10] sm:$0xf]
  %v196 = vld [vmem:[%s190 + $0x14] sm:$0xf]
  %v197 = vld [vmem:[%s190 + $0x18] sm:$0xf]
  %v198 = vld [vmem:[%s190 + $0x1c] sm:$0xf]
  %v199 = vld [vmem:[%s190 + $0x20] sm:$0xf]
  %v209 = vunpack.c.l.b16 %v191
  %v210 = vunpack.c.l.b16 %v192
  %v211 = vunpack.c.l.b16 %v193
  %v212 = vunpack.c.l.b16 %v194
  %v213 = vunpack.c.l.b16 %v195
  %v214 = vunpack.c.l.b16 %v196
  %v215 = vunpack.c.l.b16 %v197
  %v216 = vunpack.c.l.b16 %v198
  %v217 = vunpack.c.l.b16 %v199
  %v218 = vpack.c.b16 %v210, %v209
  %v219 = vpack.c.b16 %v212, %v211
  %v220 = vpack.c.b16 %v214, %v213
  %v221 = vpack.c.b16 %v216, %v215
  %v222 = vpack.c.b16 %v217, %v217
  %v228 = vsel %vm62, %v222, 0
  %230 = vmatprep.subr.bf16.mxu0 0
  %231 = vmatpush1.bf16.msra.mxu0 %v218
  %232 = vmatprep.subr.bf16.mxu0 0
  %233 = vmatpush1.bf16.msra.mxu0 %v219
  %234 = vmatprep.subr.bf16.mxu0 0
  %235 = vmatpush1.bf16.msra.mxu0 %v220
  %236 = vmatprep.subr.bf16.mxu0 0
  %237 = vmatpush1.bf16.msra.mxu0 %v221
  %238 = vmatprep.subr.bf16.mxu0 0
  %239 = vmatpush1.bf16.msra.mxu0 %v228
  %240 = vmatprep.subr.bf16.mxu0 0
  %241 = vmatpush1.bf16.msra.mxu0 0
  %242 = vmatprep.subr.bf16.mxu0 0
  %243 = vmatpush1.bf16.msra.mxu0 0
  %244 = vmatprep.subr.bf16.mxu0 0
  %245 = vmatpush1.bf16.msra.mxu0 0
  %246 = vmatprep.subr.bf16.mxu0 0
  %247 = vmatpush1.bf16.msra.mxu0 0
  %248 = vmatprep.subr.bf16.mxu0 0
  %249 = vmatpush1.bf16.msra.mxu0 0
  %250 = vmatprep.subr.bf16.mxu0 0
  %251 = vmatpush1.bf16.msra.mxu0 0
  %252 = vmatprep.subr.bf16.mxu0 0
  %253 = vmatpush1.bf16.msra.mxu0 0
  %254 = vmatprep.subr.bf16.mxu0 0
  %255 = vmatpush1.bf16.msra.mxu0 0
  %256 = vmatprep.subr.bf16.mxu0 0
  %257 = vmatpush1.bf16.msra.mxu0 0
  %258 = vmatprep.subr.bf16.mxu0 0
  %259 = vmatpush1.bf16.msra.mxu0 0
  %260 = vmatprep.subr.bf16.mxu0 0
  %261 = vmatpush1.bf16.msra.mxu0 0
  %262 = vmatprep.mubr.bf16.mxu0 0
  %263 = vmatmul.mubr.bf16.gmra.mrb[0].mxu0 %v60
  %v264 = vpop.f32.mrb[0].mxu0
  %v265 = vadd.f32 0.0, %v264
  %v266 = vpop.f32.mrb[0].mxu0
  %v267 = vpop.f32.mrb[0].mxu0
  %v268 = vadd.f32 0.0, %v267
  %v269 = vpop.f32.mrb[0].mxu0
  %270 = vdwg.mxu0
  %v271 = vmax.f32 %v188, %v265
  %v272 = vmax.f32 %v189, %v268
  %s273 = scalar_lea.vmem %s0, 108
  %v274 = vld [vmem:[%s273] sm:$0xf]
  %v275 = vld [vmem:[%s273 + $0x4] sm:$0xf]
  %v276 = vld [vmem:[%s273 + $0x8] sm:$0xf]
  %v277 = vld [vmem:[%s273 + $0xc] sm:$0xf]
  %v278 = vld [vmem:[%s273 + $0x10] sm:$0xf]
  %v279 = vld [vmem:[%s273 + $0x14] sm:$0xf]
  %v280 = vld [vmem:[%s273 + $0x18] sm:$0xf]
  %v281 = vld [vmem:[%s273 + $0x1c] sm:$0xf]
  %v282 = vld [vmem:[%s273 + $0x20] sm:$0xf]
  %v292 = vunpack.c.l.b16 %v274
  %v293 = vunpack.c.l.b16 %v275
  %v294 = vunpack.c.l.b16 %v276
  %v295 = vunpack.c.l.b16 %v277
  %v296 = vunpack.c.l.b16 %v278
  %v297 = vunpack.c.l.b16 %v279
  %v298 = vunpack.c.l.b16 %v280
  %v299 = vunpack.c.l.b16 %v281
  %v300 = vunpack.c.l.b16 %v282
  %v301 = vpack.c.b16 %v293, %v292
  %v302 = vpack.c.b16 %v295, %v294
  %v303 = vpack.c.b16 %v297, %v296
  %v304 = vpack.c.b16 %v299, %v298
  %v305 = vpack.c.b16 %v300, %v300
  %v311 = vsel %vm62, %v305, 0
  %313 = vmatprep.subr.bf16.mxu0 0
  %314 = vmatpush1.bf16.msra.mxu0 %v301
  %315 = vmatprep.subr.bf16.mxu0 0
  %316 = vmatpush1.bf16.msra.mxu0 %v302
  %317 = vmatprep.subr.bf16.mxu0 0
  %318 = vmatpush1.bf16.msra.mxu0 %v303
  %319 = vmatprep.subr.bf16.mxu0 0
  %320 = vmatpush1.bf16.msra.mxu0 %v304
  %321 = vmatprep.subr.bf16.mxu0 0
  %322 = vmatpush1.bf16.msra.mxu0 %v311
  %323 = vmatprep.subr.bf16.mxu0 0
  %324 = vmatpush1.bf16.msra.mxu0 0
  %325 = vmatprep.subr.bf16.mxu0 0
  %326 = vmatpush1.bf16.msra.mxu0 0
  %327 = vmatprep.subr.bf16.mxu0 0
  %328 = vmatpush1.bf16.msra.mxu0 0
  %329 = vmatprep.subr.bf16.mxu0 0
  %330 = vmatpush1.bf16.msra.mxu0 0
  %331 = vmatprep.subr.bf16.mxu0 0
  %332 = vmatpush1.bf16.msra.mxu0 0
  %333 = vmatprep.subr.bf16.mxu0 0
  %334 = vmatpush1.bf16.msra.mxu0 0
  %335 = vmatprep.subr.bf16.mxu0 0
  %336 = vmatpush1.bf16.msra.mxu0 0
  %337 = vmatprep.subr.bf16.mxu0 0
  %338 = vmatpush1.bf16.msra.mxu0 0
  %339 = vmatprep.subr.bf16.mxu0 0
  %340 = vmatpush1.bf16.msra.mxu0 0
  %341 = vmatprep.subr.bf16.mxu0 0
  %342 = vmatpush1.bf16.msra.mxu0 0
  %343 = vmatprep.subr.bf16.mxu0 0
  %344 = vmatpush1.bf16.msra.mxu0 0
  %345 = vmatprep.mubr.bf16.mxu0 0
  %346 = vmatmul.mubr.bf16.gmra.mrb[0].mxu0 %v60
  %v347 = vpop.f32.mrb[0].mxu0
  %v348 = vadd.f32 0.0, %v347
  %v349 = vpop.f32.mrb[0].mxu0
  %v350 = vpop.f32.mrb[0].mxu0
  %v351 = vadd.f32 0.0, %v350
  %v352 = vpop.f32.mrb[0].mxu0
  %353 = vdwg.mxu0
  %v354 = vmax.f32 %v271, %v348
  %v355 = vmax.f32 %v272, %v351
  %v356 = vld [vmem:[%s2] sm:$0xff]
  %v357 = vld [vmem:[%s2 + $0x8] sm:$0xff]
  %359 = vset.pattern.permute.xlu0 0
  %360 = vperm.xlu0 %359, %v356
  %v361 = vpop.permute.xlu0 %360
  %364 = vset.pattern.permute.xlu0 0
  %365 = vperm.xlu0 %364, %v357
  %v366 = vpop.permute.xlu0 %365
  %v368 = vadd.f32 %v354, %v361
  %v369 = vadd.f32 %v355, %v366
  %v370 = vmax.f32 %v368, 0.0
  %v371 = vmax.f32 %v369, 0.0
  %372 = vst [vmem:[%s3] sm:$0xff] %v370
  %373 = vst [vmem:[%s3 + $0x8] sm:$0xff] %v371
  // Predicated region
  $region14: #{cnn_forward.4} parent=0 // pred_check
    _
  $region15: #{cnn_forward.4} parent=0 // pred_check_branch
    %375 = sbr.rel (0) target = $region17
  $region16: #{cnn_forward.4} parent=0 // pred_region
    _
  $region17: #{cnn_forward.4} parent=0 // pred_fallthru
    _
  // Predicated region
  $region18: #{cnn_forward.4} parent=0 // pred_check
    _
  $region19: #{cnn_forward.4} parent=0 // pred_check_branch
    %377 = sbr.rel (0) target = $region21
  $region20: #{cnn_forward.4} parent=0 // pred_region
    _
  $region21: #{cnn_forward.4} parent=0 // pred_fallthru
    _

// kernel: cnn_forward.5
$region0: #{cnn_forward.5}
  #allocation0 [shape = 'u32[]', space=smem, size = 0x4, offset = 0x4, fixed_abs, tag = 'smem constant byte address 0x4 - core index']
  #allocation1 [shape = 'u32[144,128]{1,0:T(1,128)}', space=vmem, size = 0x12000, scoped, tag = 'internal scratch']
  %s0 = inlined_call_operand.vmem [shape: bf16[784,128], index: 0, kind: input, shape index: {}]
  %s1 = inlined_call_operand.vmem [shape: bf16[10,784], index: 1, kind: input, shape index: {}]
  %s2 = inlined_call_operand.vmem [shape: f32[10,1], index: 2, kind: input, shape index: {}]
  %s3 = inlined_call_operand.vmem [shape: f32[10,128], index: 3, kind: output, shape index: {}]
  %s4 = sld [smem:[#allocation0]]
  $region22: #{cnn_forward.5} parent=0
    _
  %s6 = ssub.s32 1, %s4
  %s7 = scalar_select 0, %s6, %s4
  // Predicated region
  $region2: #{cnn_forward.5} parent=0 // pred_check
    _
  $region3: #{cnn_forward.5} parent=0 // pred_check_branch
    %9 = sbr.rel (0) target = $region5
  $region4: #{cnn_forward.5} parent=0 // pred_region
    _
  $region5: #{cnn_forward.5} parent=0 // pred_fallthru
    _
  // Predicated region
  $region6: #{cnn_forward.5} parent=0 // pred_check
    _
  $region7: #{cnn_forward.5} parent=0 // pred_check_branch
    %11 = sbr.rel (0) target = $region9
  $region8: #{cnn_forward.5} parent=0 // pred_region
    _
  $region9: #{cnn_forward.5} parent=0 // pred_fallthru
    _
  // Predicated region
  $region10: #{cnn_forward.5} parent=0 // pred_check
    _
  $region11: #{cnn_forward.5} parent=0 // pred_check_branch
    %13 = sbr.rel (0) target = $region13
  $region12: #{cnn_forward.5} parent=0 // pred_region
    _
  $region13: #{cnn_forward.5} parent=0 // pred_fallthru
    _
  %v15 = vld [vmem:[%s1] sm:$0xff]
  %v16 = vld [vmem:[%s1 + $0x8] sm:$0xff]
  %v17 = vld [vmem:[%s1 + $0x10] sm:$0xff]
  %v18 = vld [vmem:[%s1 + $0x18] sm:$0xf]
  %v19 = vld [vmem:[%s1 + $0x1c] sm:$0x11]
  %v20 = vld [vmem:[%s1 + $0x24] sm:$0x11]
  %v21 = vld [vmem:[%s1 + $0x2c] sm:$0x11]
  %v22 = vld [vmem:[%s1 + $0x34] sm:$0x1]
  %v23 = vld [vmem:[%s0] sm:$0xf]
  %v24 = vld [vmem:[%s0 + $0x4] sm:$0xf]
  %v25 = vld [vmem:[%s0 + $0x8] sm:$0xf]
  %v26 = vld [vmem:[%s0 + $0xc] sm:$0xf]
  %v27 = vld [vmem:[%s0 + $0x10] sm:$0xf]
  %v28 = vld [vmem:[%s0 + $0x14] sm:$0xf]
  %v29 = vld [vmem:[%s0 + $0x18] sm:$0xf]
  %v30 = vld [vmem:[%s0 + $0x1c] sm:$0xf]
  %v31 = vld [vmem:[%s0 + $0x20] sm:$0xf]
  %v32 = vld [vmem:[%s0 + $0x24] sm:$0xf]
  %v33 = vld [vmem:[%s0 + $0x28] sm:$0xf]
  %v34 = vld [vmem:[%s0 + $0x2c] sm:$0xf]
  %v35 = vld [vmem:[%s0 + $0x30] sm:$0xf]
  %v36 = vld [vmem:[%s0 + $0x34] sm:$0xf]
  %v37 = vld [vmem:[%s0 + $0x38] sm:$0xf]
  %v38 = vld [vmem:[%s0 + $0x3c] sm:$0xf]
  %v39 = vld [vmem:[%s0 + $0x40] sm:$0xf]
  %v40 = vld [vmem:[%s0 + $0x44] sm:$0xf]
  %v41 = vld [vmem:[%s0 + $0x48] sm:$0xf]
  %v42 = vld [vmem:[%s0 + $0x4c] sm:$0xf]
  %v43 = vld [vmem:[%s0 + $0x50] sm:$0xf]
  %v44 = vld [vmem:[%s0 + $0x54] sm:$0xf]
  %v45 = vld [vmem:[%s0 + $0x58] sm:$0xf]
  %v46 = vld [vmem:[%s0 + $0x5c] sm:$0xf]
  %v47 = vld [vmem:[%s0 + $0x60] sm:$0xf]
  %v48 = vld [vmem:[%s0 + $0x64] sm:$0xf]
  %v49 = vld [vmem:[%s0 + $0x68] sm:$0xf]
  %v50 = vld [vmem:[%s0 + $0x6c] sm:$0xf]
  %v51 = vld [vmem:[%s0 + $0x70] sm:$0xf]
  %v52 = vld [vmem:[%s0 + $0x74] sm:$0xf]
  %v53 = vld [vmem:[%s0 + $0x78] sm:$0xf]
  %v54 = vld [vmem:[%s0 + $0x7c] sm:$0xf]
  %v55 = vld [vmem:[%s0 + $0x80] sm:$0xf]
  %v56 = vld [vmem:[%s0 + $0x84] sm:$0xf]
  %v57 = vld [vmem:[%s0 + $0x88] sm:$0xf]
  %v58 = vld [vmem:[%s0 + $0x8c] sm:$0xf]
  %v59 = vld [vmem:[%s0 + $0x90] sm:$0xf]
  %v60 = vld [vmem:[%s0 + $0x94] sm:$0xf]
  %v61 = vld [vmem:[%s0 + $0x98] sm:$0xf]
  %v62 = vld [vmem:[%s0 + $0x9c] sm:$0xf]
  %v63 = vld [vmem:[%s0 + $0xa0] sm:$0xf]
  %v64 = vld [vmem:[%s0 + $0xa4] sm:$0xf]
  %v65 = vld [vmem:[%s0 + $0xa8] sm:$0xf]
  %v66 = vld [vmem:[%s0 + $0xac] sm:$0xf]
  %v67 = vld [vmem:[%s0 + $0xb0] sm:$0xf]
  %v68 = vld [vmem:[%s0 + $0xb4] sm:$0xf]
  %v69 = vld [vmem:[%s0 + $0xb8] sm:$0xf]
  %v70 = vld [vmem:[%s0 + $0xbc] sm:$0xf]
  %v71 = vld [vmem:[%s0 + $0xc0] sm:$0xf]
  %v72 = vld [vmem:[%s0 + $0xc4] sm:$0xf]
  %v73 = vld [vmem:[%s0 + $0xc8] sm:$0xf]
  %v74 = vld [vmem:[%s0 + $0xcc] sm:$0xf]
  %v75 = vld [vmem:[%s0 + $0xd0] sm:$0xf]
  %v76 = vld [vmem:[%s0 + $0xd4] sm:$0xf]
  %v77 = vld [vmem:[%s0 + $0xd8] sm:$0xf]
  %v78 = vld [vmem:[%s0 + $0xdc] sm:$0xf]
  %v79 = vld [vmem:[%s0 + $0xe0] sm:$0xf]
  %v80 = vld [vmem:[%s0 + $0xe4] sm:$0xf]
  %v81 = vld [vmem:[%s0 + $0xe8] sm:$0xf]
  %v82 = vld [vmem:[%s0 + $0xec] sm:$0xf]
  %v83 = vld [vmem:[%s0 + $0xf0] sm:$0xf]
  %v84 = vld [vmem:[%s0 + $0xf4] sm:$0xf]
  %v85 = vld [vmem:[%s0 + $0xf8] sm:$0xf]
  %v86 = vld [vmem:[%s0 + $0xfc] sm:$0xf]
  %v87 = vld [vmem:[%s0 + $0x100] sm:$0xf]
  %v88 = vld [vmem:[%s0 + $0x104] sm:$0xf]
  %v89 = vld [vmem:[%s0 + $0x108] sm:$0xf]
  %v90 = vld [vmem:[%s0 + $0x10c] sm:$0xf]
  %v91 = vld [vmem:[%s0 + $0x110] sm:$0xf]
  %v92 = vld [vmem:[%s0 + $0x114] sm:$0xf]
  %v93 = vld [vmem:[%s0 + $0x118] sm:$0xf]
  %v94 = vld [vmem:[%s0 + $0x11c] sm:$0xf]
  %v95 = vld [vmem:[%s0 + $0x120] sm:$0xf]
  %v96 = vld [vmem:[%s0 + $0x124] sm:$0xf]
  %v97 = vld [vmem:[%s0 + $0x128] sm:$0xf]
  %v98 = vld [vmem:[%s0 + $0x12c] sm:$0xf]
  %v99 = vld [vmem:[%s0 + $0x130] sm:$0xf]
  %v100 = vld [vmem:[%s0 + $0x134] sm:$0xf]
  %v101 = vld [vmem:[%s0 + $0x138] sm:$0xf]
  %v102 = vld [vmem:[%s0 + $0x13c] sm:$0xf]
  %v103 = vld [vmem:[%s0 + $0x140] sm:$0xf]
  %v104 = vld [vmem:[%s0 + $0x144] sm:$0xf]
  %v105 = vld [vmem:[%s0 + $0x148] sm:$0xf]
  %v106 = vld [vmem:[%s0 + $0x14c] sm:$0xf]
  %v107 = vld [vmem:[%s0 + $0x150] sm:$0xf]
  %v108 = vld [vmem:[%s0 + $0x154] sm:$0xf]
  %v109 = vld [vmem:[%s0 + $0x158] sm:$0xf]
  %v110 = vld [vmem:[%s0 + $0x15c] sm:$0xf]
  %v111 = vld [vmem:[%s0 + $0x160] sm:$0xf]
  %v112 = vld [vmem:[%s0 + $0x164] sm:$0xf]
  %v113 = vld [vmem:[%s0 + $0x168] sm:$0xf]
  %v114 = vld [vmem:[%s0 + $0x16c] sm:$0xf]
  %v115 = vld [vmem:[%s0 + $0x170] sm:$0xf]
  %v116 = vld [vmem:[%s0 + $0x174] sm:$0xf]
  %v117 = vld [vmem:[%s0 + $0x178] sm:$0xf]
  %v118 = vld [vmem:[%s0 + $0x17c] sm:$0xf]
  %v119 = vld [vmem:[%s0 + $0x180] sm:$0xf]
  %v120 = vld [vmem:[%s0 + $0x184] sm:$0xf]
  %v121 = vld [vmem:[%s2] sm:$0xff]
  %v122 = vld [vmem:[%s2 + $0x8] sm:$0x3]
  %124 = vset.pattern.permute.xlu0 0
  %125 = vperm.xlu0 %124, %v121
  %v126 = vpop.permute.xlu0 %125
  %129 = vset.pattern.permute.xlu0 0
  %130 = vperm.xlu0 %129, %v122
  %v131 = vpop.permute.xlu0 %130
  %v141 = vunpack.c.l.b16 %v15
  %v142 = vunpack.c.h.b16 %v15
  %v143 = vunpack.c.l.b16 %v16
  %v144 = vunpack.c.h.b16 %v16
  %v145 = vunpack.c.l.b16 %v17
  %v146 = vunpack.c.h.b16 %v17
  %v147 = vunpack.c.l.b16 %v18
  %v148 = vunpack.c.l.b16 %v19
  %v149 = vunpack.c.h.b16 %v19
  %v150 = vunpack.c.l.b16 %v20
  %v151 = vunpack.c.h.b16 %v20
  %v152 = vunpack.c.l.b16 %v21
  %v153 = vunpack.c.h.b16 %v21
  %v154 = vunpack.c.l.b16 %v22
  %v155 = vpack.c.b16 %v148, %v141
  %v156 = vpack.c.b16 %v149, %v142
  %v157 = vpack.c.b16 %v150, %v143
  %v158 = vpack.c.b16 %v151, %v144
  %v159 = vpack.c.b16 %v152, %v145
  %v160 = vpack.c.b16 %v153, %v146
  %v161 = vpack.c.b16 %v154, %v147
  %v266 = vunpack.c.l.b16 %v23
  %v267 = vunpack.c.l.b16 %v24
  %v268 = vunpack.c.l.b16 %v25
  %v269 = vunpack.c.l.b16 %v26
  %v270 = vunpack.c.l.b16 %v27
  %v271 = vunpack.c.l.b16 %v28
  %v272 = vunpack.c.l.b16 %v29
  %v273 = vunpack.c.l.b16 %v30
  %v274 = vunpack.c.l.b16 %v31
  %v275 = vunpack.c.l.b16 %v32
  %v276 = vunpack.c.l.b16 %v33
  %v277 = vunpack.c.l.b16 %v34
  %v278 = vunpack.c.l.b16 %v35
  %v279 = vunpack.c.l.b16 %v36
  %v280 = vunpack.c.l.b16 %v37
  %v281 = vunpack.c.l.b16 %v38
  %v282 = vunpack.c.l.b16 %v39
  %v283 = vunpack.c.l.b16 %v40
  %v284 = vunpack.c.l.b16 %v41
  %v285 = vunpack.c.l.b16 %v42
  %v286 = vunpack.c.l.b16 %v43
  %v287 = vunpack.c.l.b16 %v44
  %v288 = vunpack.c.l.b16 %v45
  %v289 = vunpack.c.l.b16 %v46
  %v290 = vunpack.c.l.b16 %v47
  %v291 = vunpack.c.l.b16 %v48
  %v292 = vunpack.c.l.b16 %v49
  %v293 = vunpack.c.l.b16 %v50
  %v294 = vunpack.c.l.b16 %v51
  %v295 = vunpack.c.l.b16 %v52
  %v296 = vunpack.c.l.b16 %v53
  %v297 = vunpack.c.l.b16 %v54
  %v298 = vunpack.c.l.b16 %v55
  %v299 = vunpack.c.l.b16 %v56
  %v300 = vunpack.c.l.b16 %v57
  %v301 = vunpack.c.l.b16 %v58
  %v302 = vunpack.c.l.b16 %v59
  %v303 = vunpack.c.l.b16 %v60
  %v304 = vunpack.c.l.b16 %v61
  %v305 = vunpack.c.l.b16 %v62
  %v306 = vunpack.c.l.b16 %v63
  %v307 = vunpack.c.l.b16 %v64
  %v308 = vunpack.c.l.b16 %v65
  %v309 = vunpack.c.l.b16 %v66
  %v310 = vunpack.c.l.b16 %v67
  %v311 = vunpack.c.l.b16 %v68
  %v312 = vunpack.c.l.b16 %v69
  %v313 = vunpack.c.l.b16 %v70
  %v314 = vunpack.c.l.b16 %v71
  %v315 = vunpack.c.l.b16 %v72
  %v316 = vunpack.c.l.b16 %v73
  %v317 = vunpack.c.l.b16 %v74
  %v318 = vunpack.c.l.b16 %v75
  %v319 = vunpack.c.l.b16 %v76
  %v320 = vunpack.c.l.b16 %v77
  %v321 = vunpack.c.l.b16 %v78
  %v322 = vunpack.c.l.b16 %v79
  %v323 = vunpack.c.l.b16 %v80
  %v324 = vunpack.c.l.b16 %v81
  %v325 = vunpack.c.l.b16 %v82
  %v326 = vunpack.c.l.b16 %v83
  %v327 = vunpack.c.l.b16 %v84
  %v328 = vunpack.c.l.b16 %v85
  %v329 = vunpack.c.l.b16 %v86
  %v330 = vunpack.c.l.b16 %v87
  %v331 = vunpack.c.l.b16 %v88
  %v332 = vunpack.c.l.b16 %v89
  %v333 = vunpack.c.l.b16 %v90
  %v334 = vunpack.c.l.b16 %v91
  %v335 = vunpack.c.l.b16 %v92
  %v336 = vunpack.c.l.b16 %v93
  %v337 = vunpack.c.l.b16 %v94
  %v338 = vunpack.c.l.b16 %v95
  %v339 = vunpack.c.l.b16 %v96
  %v340 = vunpack.c.l.b16 %v97
  %v341 = vunpack.c.l.b16 %v98
  %v342 = vunpack.c.l.b16 %v99
  %v343 = vunpack.c.l.b16 %v100
  %v344 = vunpack.c.l.b16 %v101
  %v345 = vunpack.c.l.b16 %v102
  %v346 = vunpack.c.l.b16 %v103
  %v347 = vunpack.c.l.b16 %v104
  %v348 = vunpack.c.l.b16 %v105
  %v349 = vunpack.c.l.b16 %v106
  %v350 = vunpack.c.l.b16 %v107
  %v351 = vunpack.c.l.b16 %v108
  %v352 = vunpack.c.l.b16 %v109
  %v353 = vunpack.c.l.b16 %v110
  %v354 = vunpack.c.l.b16 %v111
  %v355 = vunpack.c.l.b16 %v112
  %v356 = vunpack.c.l.b16 %v113
  %v357 = vunpack.c.l.b16 %v114
  %v358 = vunpack.c.l.b16 %v115
  %v359 = vunpack.c.l.b16 %v116
  %v360 = vunpack.c.l.b16 %v117
  %v361 = vunpack.c.l.b16 %v118
  %v362 = vunpack.c.l.b16 %v119
  %v363 = vunpack.c.l.b16 %v120
  %v364 = vpack.c.b16 %v267, %v266
  %v365 = vpack.c.b16 %v269, %v268
  %v366 = vpack.c.b16 %v271, %v270
  %v367 = vpack.c.b16 %v273, %v272
  %v368 = vpack.c.b16 %v275, %v274
  %v369 = vpack.c.b16 %v277, %v276
  %v370 = vpack.c.b16 %v279, %v278
  %v371 = vpack.c.b16 %v281, %v280
  %v372 = vpack.c.b16 %v283, %v282
  %v373 = vpack.c.b16 %v285, %v284
  %v374 = vpack.c.b16 %v287, %v286
  %v375 = vpack.c.b16 %v289, %v288
  %v376 = vpack.c.b16 %v291, %v290
  %v377 = vpack.c.b16 %v293, %v292
  %v378 = vpack.c.b16 %v295, %v294
  %v379 = vpack.c.b16 %v297, %v296
  %v380 = vpack.c.b16 %v299, %v298
  %v381 = vpack.c.b16 %v301, %v300
  %v382 = vpack.c.b16 %v303, %v302
  %v383 = vpack.c.b16 %v305, %v304
  %v384 = vpack.c.b16 %v307, %v306
  %v385 = vpack.c.b16 %v309, %v308
  %v386 = vpack.c.b16 %v311, %v310
  %v387 = vpack.c.b16 %v313, %v312
  %v388 = vpack.c.b16 %v315, %v314
  %v389 = vpack.c.b16 %v317, %v316
  %v390 = vpack.c.b16 %v319, %v318
  %v391 = vpack.c.b16 %v321, %v320
  %v392 = vpack.c.b16 %v323, %v322
  %v393 = vpack.c.b16 %v325, %v324
  %v394 = vpack.c.b16 %v327, %v326
  %v395 = vpack.c.b16 %v329, %v328
  %v396 = vpack.c.b16 %v331, %v330
  %v397 = vpack.c.b16 %v333, %v332
  %v398 = vpack.c.b16 %v335, %v334
  %v399 = vpack.c.b16 %v337, %v336
  %v400 = vpack.c.b16 %v339, %v338
  %v401 = vpack.c.b16 %v341, %v340
  %v402 = vpack.c.b16 %v343, %v342
  %v403 = vpack.c.b16 %v345, %v344
  %v404 = vpack.c.b16 %v347, %v346
  %v405 = vpack.c.b16 %v349, %v348
  %v406 = vpack.c.b16 %v351, %v350
  %v407 = vpack.c.b16 %v353, %v352
  %v408 = vpack.c.b16 %v355, %v354
  %v409 = vpack.c.b16 %v357, %v356
  %v410 = vpack.c.b16 %v359, %v358
  %v411 = vpack.c.b16 %v361, %v360
  %v412 = vpack.c.b16 %v363, %v362
  %vm462 = vcmask 130048
  %v464 = vsel %vm462, %v161, 0
  %466 = vmatprep.subr.bf16.mxu0 0
  %467 = vmatpush1.bf16.msra.mxu0 %v364
  %468 = vmatprep.subr.bf16.mxu0 0
  %469 = vmatpush1.bf16.msra.mxu0 %v365
  %470 = vmatprep.subr.bf16.mxu0 0
  %471 = vmatpush1.bf16.msra.mxu0 %v366
  %472 = vmatprep.subr.bf16.mxu0 0
  %473 = vmatpush1.bf16.msra.mxu0 %v367
  %474 = vmatprep.subr.bf16.mxu0 0
  %475 = vmatpush1.bf16.msra.mxu0 %v368
  %476 = vmatprep.subr.bf16.mxu0 0
  %477 = vmatpush1.bf16.msra.mxu0 %v369
  %478 = vmatprep.subr.bf16.mxu0 0
  %479 = vmatpush1.bf16.msra.mxu0 %v370
  %480 = vmatprep.subr.bf16.mxu0 0
  %481 = vmatpush1.bf16.msra.mxu0 %v371
  %482 = vmatprep.subr.bf16.mxu0 0
  %483 = vmatpush1.bf16.msra.mxu0 %v372
  %484 = vmatprep.subr.bf16.mxu0 0
  %485 = vmatpush1.bf16.msra.mxu0 %v373
  %486 = vmatprep.subr.bf16.mxu0 0
  %487 = vmatpush1.bf16.msra.mxu0 %v374
  %488 = vmatprep.subr.bf16.mxu0 0
  %489 = vmatpush1.bf16.msra.mxu0 %v375
  %490 = vmatprep.subr.bf16.mxu0 0
  %491 = vmatpush1.bf16.msra.mxu0 %v376
  %492 = vmatprep.subr.bf16.mxu0 0
  %493 = vmatpush1.bf16.msra.mxu0 %v377
  %494 = vmatprep.subr.bf16.mxu0 0
  %495 = vmatpush1.bf16.msra.mxu0 %v378
  %496 = vmatprep.subr.bf16.mxu0 0
  %497 = vmatpush1.bf16.msra.mxu0 %v379
  %498 = vmatprep.mubr.bf16.mxu0 %v156
  %499 = vmatmul.mubr.bf16.gmra.mrb[0].mxu0 %v155
  %v500 = vpop.f32.mrb[0].mxu0
  %v501 = vadd.f32 %v126, %v500
  %v502 = vpop.f32.mrb[0].mxu0
  %v503 = vpop.f32.mrb[0].mxu0
  %v504 = vadd.f32 %v131, %v503
  %v505 = vpop.f32.mrb[0].mxu0
  %506 = vdwg.mxu0
  %507 = vmatprep.subr.bf16.mxu0 0
  %508 = vmatpush1.bf16.msra.mxu0 %v380
  %509 = vmatprep.subr.bf16.mxu0 0
  %510 = vmatpush1.bf16.msra.mxu0 %v381
  %511 = vmatprep.subr.bf16.mxu0 0
  %512 = vmatpush1.bf16.msra.mxu0 %v382
  %513 = vmatprep.subr.bf16.mxu0 0
  %514 = vmatpush1.bf16.msra.mxu0 %v383
  %515 = vmatprep.subr.bf16.mxu0 0
  %516 = vmatpush1.bf16.msra.mxu0 %v384
  %517 = vmatprep.subr.bf16.mxu0 0
  %518 = vmatpush1.bf16.msra.mxu0 %v385
  %519 = vmatprep.subr.bf16.mxu0 0
  %520 = vmatpush1.bf16.msra.mxu0 %v386
  %521 = vmatprep.subr.bf16.mxu0 0
  %522 = vmatpush1.bf16.msra.mxu0 %v387
  %523 = vmatprep.subr.bf16.mxu0 0
  %524 = vmatpush1.bf16.msra.mxu0 %v388
  %525 = vmatprep.subr.bf16.mxu0 0
  %526 = vmatpush1.bf16.msra.mxu0 %v389
  %527 = vmatprep.subr.bf16.mxu0 0
  %528 = vmatpush1.bf16.msra.mxu0 %v390
  %529 = vmatprep.subr.bf16.mxu0 0
  %530 = vmatpush1.bf16.msra.mxu0 %v391
  %531 = vmatprep.subr.bf16.mxu0 0
  %532 = vmatpush1.bf16.msra.mxu0 %v392
  %533 = vmatprep.subr.bf16.mxu0 0
  %534 = vmatpush1.bf16.msra.mxu0 %v393
  %535 = vmatprep.subr.bf16.mxu0 0
  %536 = vmatpush1.bf16.msra.mxu0 %v394
  %537 = vmatprep.subr.bf16.mxu0 0
  %538 = vmatpush1.bf16.msra.mxu0 %v395
  %539 = vmatprep.mubr.bf16.mxu0 %v158
  %540 = vmatmul.mubr.bf16.gmra.mrb[0].mxu0 %v157
  %v541 = vpop.f32.mrb[0].mxu0
  %v542 = vadd.f32 %v501, %v541
  %v543 = vpop.f32.mrb[0].mxu0
  %v544 = vpop.f32.mrb[0].mxu0
  %v545 = vadd.f32 %v504, %v544
  %v546 = vpop.f32.mrb[0].mxu0
  %547 = vdwg.mxu0
  %548 = vmatprep.subr.bf16.mxu0 0
  %549 = vmatpush1.bf16.msra.mxu0 %v396
  %550 = vmatprep.subr.bf16.mxu0 0
  %551 = vmatpush1.bf16.msra.mxu0 %v397
  %552 = vmatprep.subr.bf16.mxu0 0
  %553 = vmatpush1.bf16.msra.mxu0 %v398
  %554 = vmatprep.subr.bf16.mxu0 0
  %555 = vmatpush1.bf16.msra.mxu0 %v399
  %556 = vmatprep.subr.bf16.mxu0 0
  %557 = vmatpush1.bf16.msra.mxu0 %v400
  %558 = vmatprep.subr.bf16.mxu0 0
  %559 = vmatpush1.bf16.msra.mxu0 %v401
  %560 = vmatprep.subr.bf16.mxu0 0
  %561 = vmatpush1.bf16.msra.mxu0 %v402
  %562 = vmatprep.subr.bf16.mxu0 0
  %563 = vmatpush1.bf16.msra.mxu0 %v403
  %564 = vmatprep.subr.bf16.mxu0 0
  %565 = vmatpush1.bf16.msra.mxu0 %v404
  %566 = vmatprep.subr.bf16.mxu0 0
  %567 = vmatpush1.bf16.msra.mxu0 %v405
  %568 = vmatprep.subr.bf16.mxu0 0
  %569 = vmatpush1.bf16.msra.mxu0 %v406
  %570 = vmatprep.subr.bf16.mxu0 0
  %571 = vmatpush1.bf16.msra.mxu0 %v407
  %572 = vmatprep.subr.bf16.mxu0 0
  %573 = vmatpush1.bf16.msra.mxu0 %v408
  %574 = vmatprep.subr.bf16.mxu0 0
  %575 = vmatpush1.bf16.msra.mxu0 %v409
  %576 = vmatprep.subr.bf16.mxu0 0
  %577 = vmatpush1.bf16.msra.mxu0 %v410
  %578 = vmatprep.subr.bf16.mxu0 0
  %579 = vmatpush1.bf16.msra.mxu0 %v411
  %580 = vmatprep.mubr.bf16.mxu0 %v160
  %581 = vmatmul.mubr.bf16.gmra.mrb[0].mxu0 %v159
  %v582 = vpop.f32.mrb[0].mxu0
  %v583 = vadd.f32 %v542, %v582
  %v584 = vpop.f32.mrb[0].mxu0
  %v585 = vpop.f32.mrb[0].mxu0
  %v586 = vadd.f32 %v545, %v585
  %v587 = vpop.f32.mrb[0].mxu0
  %588 = vdwg.mxu0
  %589 = vmatprep.subr.bf16.mxu0 0
  %590 = vmatpush1.bf16.msra.mxu0 %v412
  %591 = vmatprep.subr.bf16.mxu0 0
  %592 = vmatpush1.bf16.msra.mxu0 0
  %593 = vmatprep.subr.bf16.mxu0 0
  %594 = vmatpush1.bf16.msra.mxu0 0
  %595 = vmatprep.subr.bf16.mxu0 0
  %596 = vmatpush1.bf16.msra.mxu0 0
  %597 = vmatprep.subr.bf16.mxu0 0
  %598 = vmatpush1.bf16.msra.mxu0 0
  %599 = vmatprep.subr.bf16.mxu0 0
  %600 = vmatpush1.bf16.msra.mxu0 0
  %601 = vmatprep.subr.bf16.mxu0 0
  %602 = vmatpush1.bf16.msra.mxu0 0
  %603 = vmatprep.subr.bf16.mxu0 0
  %604 = vmatpush1.bf16.msra.mxu0 0
  %605 = vmatprep.subr.bf16.mxu0 0
  %606 = vmatpush1.bf16.msra.mxu0 0
  %607 = vmatprep.subr.bf16.mxu0 0
  %608 = vmatpush1.bf16.msra.mxu0 0
  %609 = vmatprep.subr.bf16.mxu0 0
  %610 = vmatpush1.bf16.msra.mxu0 0
  %611 = vmatprep.subr.bf16.mxu0 0
  %612 = vmatpush1.bf16.msra.mxu0 0
  %613 = vmatprep.subr.bf16.mxu0 0
  %614 = vmatpush1.bf16.msra.mxu0 0
  %615 = vmatprep.subr.bf16.mxu0 0
  %616 = vmatpush1.bf16.msra.mxu0 0
  %617 = vmatprep.subr.bf16.mxu0 0
  %618 = vmatpush1.bf16.msra.mxu0 0
  %619 = vmatprep.subr.bf16.mxu0 0
  %620 = vmatpush1.bf16.msra.mxu0 0
  %621 = vmatprep.mubr.bf16.mxu0 0
  %622 = vmatmul.mubr.bf16.gmra.mrb[0].mxu0 %v464
  %v623 = vpop.f32.mrb[0].mxu0
  %v624 = vadd.f32 %v583, %v623
  %v625 = vpop.f32.mrb[0].mxu0
  %v626 = vpop.f32.mrb[0].mxu0
  %v627 = vadd.f32 %v586, %v626
  %v628 = vpop.f32.mrb[0].mxu0
  %629 = vdwg.mxu0
  %630 = vst [vmem:[%s3] sm:$0xff] %v624
  %631 = vst [vmem:[%s3 + $0x8] sm:$0x3] %v627
  // Predicated region
  $region14: #{cnn_forward.5} parent=0 // pred_check
    _
  $region15: #{cnn_forward.5} parent=0 // pred_check_branch
    %633 = sbr.rel (0) target = $region17
  $region16: #{cnn_forward.5} parent=0 // pred_region
    _
  $region17: #{cnn_forward.5} parent=0 // pred_fallthru
    _
  // Predicated region
  $region18: #{cnn_forward.5} parent=0 // pred_check
    _
  $region19: #{cnn_forward.5} parent=0 // pred_check_branch
    %635 = sbr.rel (0) target = $region21
  $region20: #{cnn_forward.5} parent=0 // pred_region
    _
  $region21: #{cnn_forward.5} parent=0 // pred_fallthru
    _

</llo_original>
